<compile_context>
chip_gen: v7x
topology: tpu7x:2x2x1
jax: 0.10.0
libtpu: 0.0.40
codegen_flags: <defaults>
</compile_context>

<pallas_src>
import jax
import jax.numpy as jnp
import numpy as np
from jax import lax
from jax.experimental import pallas as pl
from jax.experimental.pallas import tpu as pltpu

FEAT_DIM = 32
MAX_AA_TYPES = 22
NUM_FUNCS = 3
NUM_DIHED = 6                                # phi, psi, chi[0..3]
ANG_FEATS = 1 + 2 * 2 * NUM_FUNCS            # 13 features per dihedral angle
ANG_TOT = NUM_DIHED * ANG_FEATS              # 78
FREQ_BANDS = tuple(float(i + 1) for i in range(NUM_FUNCS)) + \
             tuple(1.0 / (i + 1) for i in range(NUM_FUNCS))

# Raw-slab lane layout (16 lanes, f32, 64 B/row):
#   0       aa index (small int, exact in f32)
#   1..6    dihedrals  [phi, psi, chi0..chi3]
#   7..12   dihedral masks [phi_m, psi_m, chi_m0..chi_m3]
#   13      residue mask
#   14,15   zero padding
RAW_W = 16
_DIH_OFF, _MASK_OFF, _RES_OFF = 1, 7, 13
_SEL_K = 8                                   # selector-matmul contraction width


def _round_up(x, m):
    return (x + m - 1) // m * m


def _angular_constants():
    """Selector matrices that expand 6 dihedrals/masks to the 78 encoded lanes."""
    freq = np.asarray(FREQ_BANDS, np.float32)                          # (6,)
    k_freq = np.concatenate([[1.0], freq, freq]).astype(np.float32)    # (13,)
    k_cos = np.concatenate([np.zeros(1 + 2 * NUM_FUNCS),
                            np.ones(2 * NUM_FUNCS)]).astype(np.float32)
    k_id = np.zeros(ANG_FEATS, np.float32)
    k_id[0] = 1.0

    sfreq = np.zeros((_SEL_K, ANG_TOT), np.float32)   # rows 6,7 stay zero
    smask = np.zeros((_SEL_K, ANG_TOT), np.float32)   # (junk lanes in the 8-wide
    for d in range(NUM_DIHED):                        #  kernel slices hit them)
        sfreq[d, d * ANG_FEATS:(d + 1) * ANG_FEATS] = k_freq
        smask[d, d * ANG_FEATS:(d + 1) * ANG_FEATS] = 1.0
    coff = (np.tile(k_cos, NUM_DIHED) * (np.pi / 2)).astype(np.float32)[None, :]
    idsel = np.tile(k_id, NUM_DIHED).astype(np.float32)[None, :]
    return (jnp.asarray(sfreq), jnp.asarray(smask),
            jnp.asarray(coff), jnp.asarray(idsel))


def encoder_kernel(raw_ref, emb_ref, sfreq_ref, smask_ref, coff_ref, idsel_ref,
                   w1a_ref, w1g_ref, b1_ref, w2_ref, b2_ref,
                   w3_ref, b3_ref, w4_ref, b4_ref, out_ref):
    """Embedding lookup + angular encoding + fused 4-layer MLP for one row tile."""
    raw = raw_ref[...]                                           # (tm, 16) f32
    tm = raw.shape[0]

    aa_idx = raw[:, 0:1].astype(jnp.int32)                       # (tm, 1)
    dih = raw[:, _DIH_OFF:_DIH_OFF + _SEL_K]                     # (tm, 8): 6 dihedrals + 2 junk
    dmask = raw[:, _MASK_OFF:_MASK_OFF + _SEL_K]                 # (tm, 8): 6 masks + 2 junk
    resmask = raw[:, _RES_OFF:_RES_OFF + 1]                      # (tm, 1)

    # Amino-acid embedding: one-hot (tm, 24) @ table (24, F) on the MXU
    # (gather-free; the table lives in VMEM for the whole grid).
    aa_pad = emb_ref.shape[0]
    onehot = (lax.broadcasted_iota(jnp.int32, (tm, aa_pad), 1) == aa_idx
              ).astype(jnp.float32)
    aa_feat = jnp.dot(onehot, emb_ref[...], preferred_element_type=jnp.float32)

    # AngularEncoding: selector matmuls broadcast dihedral d to its 13 lanes
    # (the 2 junk lanes in the 8-wide slices hit zero selector rows).  One sin
    # per lane on the EUP; cos lanes carry a +pi/2 offset (cos x = sin(x+pi/2)).
    xs = jnp.dot(dih, sfreq_ref[...], preferred_element_type=jnp.float32)      # (tm, 78) x*freq
    mexp = jnp.dot(dmask, smask_ref[...], preferred_element_type=jnp.float32)  # (tm, 78) mask
    trig = jnp.sin(xs + coff_ref[...])
    id_sel = idsel_ref[...]                                      # (1, 78): 1 on identity lanes
    code = (xs * id_sel + trig * (1.0 - id_sel)) * mexp

    # 4-layer MLP.  The first Linear is split row-wise over [aa_feat | code].
    h = (jnp.dot(aa_feat, w1a_ref[...], preferred_element_type=jnp.float32)
         + jnp.dot(code, w1g_ref[...], preferred_element_type=jnp.float32)
         + b1_ref[...])
    h = jnp.maximum(h, 0.0)
    h = jnp.maximum(jnp.dot(h, w2_ref[...], preferred_element_type=jnp.float32)
                    + b2_ref[...], 0.0)
    h = jnp.maximum(jnp.dot(h, w3_ref[...], preferred_element_type=jnp.float32)
                    + b3_ref[...], 0.0)
    h = jnp.dot(h, w4_ref[...], preferred_element_type=jnp.float32) + b4_ref[...]

    out_ref[...] = (h * resmask).astype(out_ref.dtype)


def per_residue_encoder(aa, phi, phi_mask, psi, psi_mask, chi, chi_mask,
                        mask_residue, params, *, tile_m=2048):
    N, L = aa.shape
    F = params["embed"].shape[1]
    num_aa = params["embed"].shape[0]
    M = N * L

    # ---- row tiling: big tiles amortize the ~0.35 us per-step overhead; cap
    #      so the grid has >= 2 steps ("parallel" shards across v7x's 2 TCs).
    M8 = _round_up(max(M, 8), 8)
    tile = min(_round_up(int(tile_m), 8), M8)
    if M8 // tile < 2 and M8 >= 16:
        tile = _round_up((M8 + 1) // 2, 8)
    M_pad = _round_up(M8, tile)
    num_blocks = M_pad // tile
    pad = M_pad - M

    # ---- raw slab (M_pad, 16), built directly at the padded row count so the
    #      per-column pads fuse into the concat (no extra full-array pad pass).
    def col(x, w):
        c = jnp.reshape(x, (M, w)).astype(jnp.float32)
        return jnp.pad(c, ((0, pad), (0, 0))) if pad else c

    raw = jnp.concatenate(
        [col(aa, 1), col(phi, 1), col(psi, 1), col(chi, 4),
         col(phi_mask, 1), col(psi_mask, 1), col(chi_mask, 4),
         col(mask_residue, 1),
         jnp.zeros((M_pad, RAW_W - 14), jnp.float32)],
        axis=-1)

    # ---- constants / weights, resident in VMEM for the whole grid ----
    sfreq, smask, coff, idsel = _angular_constants()
    aa_pad = _round_up(num_aa, 8)
    embed = jnp.pad(params["embed"].astype(jnp.float32),
                    ((0, aa_pad - num_aa), (0, 0)))
    w1 = params["w1"].astype(jnp.float32)
    w1_aa, w1_ang = w1[:F], w1[F:]                      # (F, 2F), (78, 2F)
    b1 = params["b1"].astype(jnp.float32)
    w2 = params["w2"].astype(jnp.float32)
    b2 = params["b2"].astype(jnp.float32)
    w3 = params["w3"].astype(jnp.float32)
    b3 = params["b3"].astype(jnp.float32)
    w4 = params["w4"].astype(jnp.float32)
    b4 = params["b4"].astype(jnp.float32)

    consts = (embed, sfreq, smask, coff, idsel,
              w1_aa, w1_ang, b1, w2, b2, w3, b3, w4, b4)

    row = lambda w: pl.BlockSpec((tile, w), lambda i: (i, 0))
    whole = lambda a: pl.BlockSpec(a.shape, lambda i: (0, 0))

    flops_per_row = 2 * (aa_pad * F                  # onehot @ embed
                         + 2 * _SEL_K * ANG_TOT      # two selector matmuls
                         + F * 2 * F                 # aa_feat @ w1_aa
                         + ANG_TOT * 2 * F           # code @ w1_ang
                         + 2 * F * F + F * F + F * F)
    const_bytes = sum(int(c.size) for c in consts) * 4
    cost = pl.CostEstimate(
        flops=int(M_pad) * int(flops_per_row),
        transcendentals=int(M_pad) * ANG_TOT,
        bytes_accessed=int(M_pad) * (RAW_W + F) * 4 + const_bytes)

    out = pl.pallas_call(
        encoder_kernel,
        out_shape=jax.ShapeDtypeStruct((M_pad, F), jnp.float32),
        grid=(num_blocks,),
        in_specs=[row(RAW_W)] + [whole(c) for c in consts],
        out_specs=row(F),
        compiler_params=pltpu.CompilerParams(
            dimension_semantics=("parallel",),
            vmem_limit_bytes=32 * 1024 * 1024),
        cost_estimate=cost,
    )(raw, *consts)

    if M_pad > M:
        out = out[:M]
    return out.reshape(N, L, F)


def reference(aa, phi, phi_mask, psi, psi_mask, chi, chi_mask, mask_residue, params):
    """Pure-JAX replica of the PyTorch forward (for verification)."""
    fb = jnp.array(FREQ_BANDS, jnp.float32)
    aa_feat = params["embed"][aa]                                     # (N,L,F)
    dihedral = jnp.concatenate([phi[..., None], psi[..., None], chi], -1)
    dmask = jnp.concatenate([phi_mask[..., None], psi_mask[..., None], chi_mask], -1)
    x = dihedral[..., None]                                           # (N,L,6,1)
    code = jnp.concatenate([x, jnp.sin(x * fb), jnp.cos(x * fb)], -1) # (N,L,6,13)
    dfeat = (code * dmask[..., None]).reshape(aa.shape[0], aa.shape[1], -1)
    h = jnp.concatenate([aa_feat, dfeat], -1)
    h = jnp.maximum(h @ params["w1"] + params["b1"], 0.0)
    h = jnp.maximum(h @ params["w2"] + params["b2"], 0.0)
    h = jnp.maximum(h @ params["w3"] + params["b3"], 0.0)
    h = h @ params["w4"] + params["b4"]
    return h * mask_residue[..., None]


if __name__ == "__main__":
    N, L, F = 2, 8, FEAT_DIM
    infeat = F + ANG_TOT                                              # F + 78

    key = jax.random.PRNGKey(0)
    ks = jax.random.split(key, 20)

    params = {
        "embed": 0.1 * jax.random.normal(ks[0], (MAX_AA_TYPES, F), jnp.float32),
        "w1": 0.1 * jax.random.normal(ks[1], (infeat, 2 * F), jnp.float32),
        "b1": 0.1 * jax.random.normal(ks[2], (1, 2 * F), jnp.float32),
        "w2": 0.1 * jax.random.normal(ks[3], (2 * F, F), jnp.float32),
        "b2": 0.1 * jax.random.normal(ks[4], (1, F), jnp.float32),
        "w3": 0.1 * jax.random.normal(ks[5], (F, F), jnp.float32),
        "b3": 0.1 * jax.random.normal(ks[6], (1, F), jnp.float32),
        "w4": 0.1 * jax.random.normal(ks[7], (F, F), jnp.float32),
        "b4": 0.1 * jax.random.normal(ks[8], (1, F), jnp.float32),
    }

    aa = jax.random.randint(ks[9], (N, L), 0, MAX_AA_TYPES, dtype=jnp.int32)
    phi = jax.random.uniform(ks[10], (N, L), jnp.float32, -np.pi, np.pi)
    psi = jax.random.uniform(ks[11], (N, L), jnp.float32, -np.pi, np.pi)
    chi = jax.random.uniform(ks[12], (N, L, 4), jnp.float32, -np.pi, np.pi)
    phi_mask = (jax.random.uniform(ks[13], (N, L)) > 0.3).astype(jnp.float32)
    psi_mask = (jax.random.uniform(ks[14], (N, L)) > 0.3).astype(jnp.float32)
    chi_mask = (jax.random.uniform(ks[15], (N, L, 4)) > 0.3).astype(jnp.float32)
    mask_residue = (jax.random.uniform(ks[16], (N, L)) > 0.2).astype(jnp.float32)

    out = per_residue_encoder(aa, phi, phi_mask, psi, psi_mask, chi, chi_mask,
                              mask_residue, params)
    out = jax.block_until_ready(out)

    ref = reference(aa, phi, phi_mask, psi, psi_mask, chi, chi_mask,
                    mask_residue, params)
    np.testing.assert_allclose(np.asarray(out), np.asarray(ref),
                               rtol=1e-4, atol=1e-4)
    print("KERNEL_OK")
</pallas_src>

<mosaic_0001>
module attributes {stable_mosaic.version = 11 : i64} {
  func.func @encoder_kernel(%arg0: i32, %arg1: memref<8x16xf32, #tpu.memory_space<vmem>>, %arg2: memref<24x32xf32, #tpu.memory_space<vmem>>, %arg3: memref<8x78xf32, #tpu.memory_space<vmem>>, %arg4: memref<8x78xf32, #tpu.memory_space<vmem>>, %arg5: memref<1x78xf32, #tpu.memory_space<vmem>>, %arg6: memref<1x78xf32, #tpu.memory_space<vmem>>, %arg7: memref<32x64xf32, #tpu.memory_space<vmem>>, %arg8: memref<78x64xf32, #tpu.memory_space<vmem>>, %arg9: memref<1x64xf32, #tpu.memory_space<vmem>>, %arg10: memref<64x32xf32, #tpu.memory_space<vmem>>, %arg11: memref<1x32xf32, #tpu.memory_space<vmem>>, %arg12: memref<32x32xf32, #tpu.memory_space<vmem>>, %arg13: memref<1x32xf32, #tpu.memory_space<vmem>>, %arg14: memref<32x32xf32, #tpu.memory_space<vmem>>, %arg15: memref<1x32xf32, #tpu.memory_space<vmem>>, %arg16: memref<8x32xf32, #tpu.memory_space<vmem>>) attributes {dimension_semantics = [#tpu.dimension_semantics<parallel>], iteration_bounds = array<i64: 2>, scalar_prefetch = 0 : i64, scratch_operands = 0 : i64, tpu.core_type = #tpu.core_type<tc>, window_params = [{transform_indices = @transform_0, window_bounds = array<i64: 8, 16>}, {pipeline_mode = #tpu.pipeline_mode<synchronous>, transform_indices = @transform_1, window_bounds = array<i64: 24, 32>}, {pipeline_mode = #tpu.pipeline_mode<synchronous>, transform_indices = @transform_2, window_bounds = array<i64: 8, 78>}, {pipeline_mode = #tpu.pipeline_mode<synchronous>, transform_indices = @transform_3, window_bounds = array<i64: 8, 78>}, {pipeline_mode = #tpu.pipeline_mode<synchronous>, transform_indices = @transform_4, window_bounds = array<i64: 1, 78>}, {pipeline_mode = #tpu.pipeline_mode<synchronous>, transform_indices = @transform_5, window_bounds = array<i64: 1, 78>}, {pipeline_mode = #tpu.pipeline_mode<synchronous>, transform_indices = @transform_6, window_bounds = array<i64: 32, 64>}, {pipeline_mode = #tpu.pipeline_mode<synchronous>, transform_indices = @transform_7, window_bounds = array<i64: 78, 64>}, {pipeline_mode = #tpu.pipeline_mode<synchronous>, transform_indices = @transform_8, window_bounds = array<i64: 1, 64>}, {pipeline_mode = #tpu.pipeline_mode<synchronous>, transform_indices = @transform_9, window_bounds = array<i64: 64, 32>}, {pipeline_mode = #tpu.pipeline_mode<synchronous>, transform_indices = @transform_10, window_bounds = array<i64: 1, 32>}, {pipeline_mode = #tpu.pipeline_mode<synchronous>, transform_indices = @transform_11, window_bounds = array<i64: 32, 32>}, {pipeline_mode = #tpu.pipeline_mode<synchronous>, transform_indices = @transform_12, window_bounds = array<i64: 1, 32>}, {pipeline_mode = #tpu.pipeline_mode<synchronous>, transform_indices = @transform_13, window_bounds = array<i64: 32, 32>}, {pipeline_mode = #tpu.pipeline_mode<synchronous>, transform_indices = @transform_14, window_bounds = array<i64: 1, 32>}, {transform_indices = @transform_15, window_bounds = array<i64: 8, 32>}]} {
    %c0 = arith.constant 0 : index
    %c0_0 = arith.constant 0 : index
    %0 = vector.load %arg1[%c0, %c0_0] : memref<8x16xf32, #tpu.memory_space<vmem>>, vector<8x16xf32>
    %1 = vector.extract_strided_slice %0 {offsets = [0, 0], sizes = [8, 1], strides = [1, 1]} : vector<8x16xf32> to vector<8x1xf32>
    %2 = arith.fptosi %1 : vector<8x1xf32> to vector<8x1xi32>
    %3 = vector.extract_strided_slice %0 {offsets = [0, 1], sizes = [8, 8], strides = [1, 1]} : vector<8x16xf32> to vector<8x8xf32>
    %4 = vector.extract_strided_slice %0 {offsets = [0, 7], sizes = [8, 8], strides = [1, 1]} : vector<8x16xf32> to vector<8x8xf32>
    %5 = vector.extract_strided_slice %0 {offsets = [0, 13], sizes = [8, 1], strides = [1, 1]} : vector<8x16xf32> to vector<8x1xf32>
    %6 = tpu.iota {dimensions = array<i32: 1>} : vector<8x24xi32>
    %7 = vector.broadcast %2 : vector<8x1xi32> to vector<8x24xi32>
    %8 = arith.cmpi eq, %6, %7 : vector<8x24xi32>
    %9 = arith.extui %8 : vector<8x24xi1> to vector<8x24xi32>
    %10 = arith.sitofp %9 : vector<8x24xi32> to vector<8x24xf32>
    %c0_1 = arith.constant 0 : index
    %c0_2 = arith.constant 0 : index
    %11 = vector.load %arg2[%c0_1, %c0_2] : memref<24x32xf32, #tpu.memory_space<vmem>>, vector<24x32xf32>
    %cst = arith.constant dense<0.000000e+00> : vector<8x32xf32>
    %12 = tpu.matmul %10, %11, %cst {dimension_numbers = #tpu.dot_dimension_numbers<[1], [0], [0], [1], [0, 0, 1, 1], [], []>} : vector<8x24xf32>, vector<24x32xf32>, vector<8x32xf32> -> vector<8x32xf32>
    %c0_3 = arith.constant 0 : index
    %c0_4 = arith.constant 0 : index
    %13 = vector.load %arg3[%c0_3, %c0_4] : memref<8x78xf32, #tpu.memory_space<vmem>>, vector<8x78xf32>
    %cst_5 = arith.constant dense<0.000000e+00> : vector<8x78xf32>
    %14 = tpu.matmul %3, %13, %cst_5 {dimension_numbers = #tpu.dot_dimension_numbers<[1], [0], [0], [1], [0, 0, 1, 1], [], []>} : vector<8x8xf32>, vector<8x78xf32>, vector<8x78xf32> -> vector<8x78xf32>
    %c0_6 = arith.constant 0 : index
    %c0_7 = arith.constant 0 : index
    %15 = vector.load %arg4[%c0_6, %c0_7] : memref<8x78xf32, #tpu.memory_space<vmem>>, vector<8x78xf32>
    %cst_8 = arith.constant dense<0.000000e+00> : vector<8x78xf32>
    %16 = tpu.matmul %4, %15, %cst_8 {dimension_numbers = #tpu.dot_dimension_numbers<[1], [0], [0], [1], [0, 0, 1, 1], [], []>} : vector<8x8xf32>, vector<8x78xf32>, vector<8x78xf32> -> vector<8x78xf32>
    %c0_9 = arith.constant 0 : index
    %c0_10 = arith.constant 0 : index
    %17 = vector.load %arg5[%c0_9, %c0_10] : memref<1x78xf32, #tpu.memory_space<vmem>>, vector<1x78xf32>
    %18 = vector.broadcast %17 : vector<1x78xf32> to vector<8x78xf32>
    %19 = arith.addf %14, %18 : vector<8x78xf32>
    %20 = math.sin %19 : vector<8x78xf32>
    %c0_11 = arith.constant 0 : index
    %c0_12 = arith.constant 0 : index
    %21 = vector.load %arg6[%c0_11, %c0_12] : memref<1x78xf32, #tpu.memory_space<vmem>>, vector<1x78xf32>
    %22 = vector.broadcast %21 : vector<1x78xf32> to vector<8x78xf32>
    %23 = arith.mulf %14, %22 : vector<8x78xf32>
    %cst_13 = arith.constant 1.000000e+00 : f32
    %24 = vector.broadcast %cst_13 : f32 to vector<1x78xf32>
    %25 = arith.subf %24, %21 : vector<1x78xf32>
    %26 = vector.broadcast %25 : vector<1x78xf32> to vector<8x78xf32>
    %27 = arith.mulf %20, %26 : vector<8x78xf32>
    %28 = arith.addf %23, %27 : vector<8x78xf32>
    %29 = arith.mulf %28, %16 : vector<8x78xf32>
    %c0_14 = arith.constant 0 : index
    %c0_15 = arith.constant 0 : index
    %30 = vector.load %arg7[%c0_14, %c0_15] : memref<32x64xf32, #tpu.memory_space<vmem>>, vector<32x64xf32>
    %cst_16 = arith.constant dense<0.000000e+00> : vector<8x64xf32>
    %31 = tpu.matmul %12, %30, %cst_16 {dimension_numbers = #tpu.dot_dimension_numbers<[1], [0], [0], [1], [0, 0, 1, 1], [], []>} : vector<8x32xf32>, vector<32x64xf32>, vector<8x64xf32> -> vector<8x64xf32>
    %c0_17 = arith.constant 0 : index
    %c0_18 = arith.constant 0 : index
    %32 = vector.load %arg8[%c0_17, %c0_18] : memref<78x64xf32, #tpu.memory_space<vmem>>, vector<78x64xf32>
    %cst_19 = arith.constant dense<0.000000e+00> : vector<8x64xf32>
    %33 = tpu.matmul %29, %32, %cst_19 {dimension_numbers = #tpu.dot_dimension_numbers<[1], [0], [0], [1], [0, 0, 1, 1], [], []>} : vector<8x78xf32>, vector<78x64xf32>, vector<8x64xf32> -> vector<8x64xf32>
    %34 = arith.addf %31, %33 : vector<8x64xf32>
    %c0_20 = arith.constant 0 : index
    %c0_21 = arith.constant 0 : index
    %35 = vector.load %arg9[%c0_20, %c0_21] : memref<1x64xf32, #tpu.memory_space<vmem>>, vector<1x64xf32>
    %36 = vector.broadcast %35 : vector<1x64xf32> to vector<8x64xf32>
    %37 = arith.addf %34, %36 : vector<8x64xf32>
    %cst_22 = arith.constant 0.000000e+00 : f32
    %38 = vector.broadcast %cst_22 : f32 to vector<8x64xf32>
    %39 = arith.maximumf %37, %38 : vector<8x64xf32>
    %c0_23 = arith.constant 0 : index
    %c0_24 = arith.constant 0 : index
    %40 = vector.load %arg10[%c0_23, %c0_24] : memref<64x32xf32, #tpu.memory_space<vmem>>, vector<64x32xf32>
    %cst_25 = arith.constant dense<0.000000e+00> : vector<8x32xf32>
    %41 = tpu.matmul %39, %40, %cst_25 {dimension_numbers = #tpu.dot_dimension_numbers<[1], [0], [0], [1], [0, 0, 1, 1], [], []>} : vector<8x64xf32>, vector<64x32xf32>, vector<8x32xf32> -> vector<8x32xf32>
    %c0_26 = arith.constant 0 : index
    %c0_27 = arith.constant 0 : index
    %42 = vector.load %arg11[%c0_26, %c0_27] : memref<1x32xf32, #tpu.memory_space<vmem>>, vector<1x32xf32>
    %43 = vector.broadcast %42 : vector<1x32xf32> to vector<8x32xf32>
    %44 = arith.addf %41, %43 : vector<8x32xf32>
    %cst_28 = arith.constant 0.000000e+00 : f32
    %45 = vector.broadcast %cst_28 : f32 to vector<8x32xf32>
    %46 = arith.maximumf %44, %45 : vector<8x32xf32>
    %c0_29 = arith.constant 0 : index
    %c0_30 = arith.constant 0 : index
    %47 = vector.load %arg12[%c0_29, %c0_30] : memref<32x32xf32, #tpu.memory_space<vmem>>, vector<32x32xf32>
    %cst_31 = arith.constant dense<0.000000e+00> : vector<8x32xf32>
    %48 = tpu.matmul %46, %47, %cst_31 {dimension_numbers = #tpu.dot_dimension_numbers<[1], [0], [0], [1], [0, 0, 1, 1], [], []>} : vector<8x32xf32>, vector<32x32xf32>, vector<8x32xf32> -> vector<8x32xf32>
    %c0_32 = arith.constant 0 : index
    %c0_33 = arith.constant 0 : index
    %49 = vector.load %arg13[%c0_32, %c0_33] : memref<1x32xf32, #tpu.memory_space<vmem>>, vector<1x32xf32>
    %50 = vector.broadcast %49 : vector<1x32xf32> to vector<8x32xf32>
    %51 = arith.addf %48, %50 : vector<8x32xf32>
    %cst_34 = arith.constant 0.000000e+00 : f32
    %52 = vector.broadcast %cst_34 : f32 to vector<8x32xf32>
    %53 = arith.maximumf %51, %52 : vector<8x32xf32>
    %c0_35 = arith.constant 0 : index
    %c0_36 = arith.constant 0 : index
    %54 = vector.load %arg14[%c0_35, %c0_36] : memref<32x32xf32, #tpu.memory_space<vmem>>, vector<32x32xf32>
    %cst_37 = arith.constant dense<0.000000e+00> : vector<8x32xf32>
    %55 = tpu.matmul %53, %54, %cst_37 {dimension_numbers = #tpu.dot_dimension_numbers<[1], [0], [0], [1], [0, 0, 1, 1], [], []>} : vector<8x32xf32>, vector<32x32xf32>, vector<8x32xf32> -> vector<8x32xf32>
    %c0_38 = arith.constant 0 : index
    %c0_39 = arith.constant 0 : index
    %56 = vector.load %arg15[%c0_38, %c0_39] : memref<1x32xf32, #tpu.memory_space<vmem>>, vector<1x32xf32>
    %57 = vector.broadcast %56 : vector<1x32xf32> to vector<8x32xf32>
    %58 = arith.addf %55, %57 : vector<8x32xf32>
    %59 = vector.broadcast %5 : vector<8x1xf32> to vector<8x32xf32>
    %60 = arith.mulf %58, %59 : vector<8x32xf32>
    %c0_40 = arith.constant 0 : index
    %c0_41 = arith.constant 0 : index
    %61 = vector.load %arg16[%c0_40, %c0_41] : memref<8x32xf32, #tpu.memory_space<vmem>>, vector<8x32xf32>
    tpu.vector_store %arg16[%c0_40, %c0_41], %60 {strides = array<i32>} : memref<8x32xf32, #tpu.memory_space<vmem>>, vector<8x32xf32>,
    return
  }
  func.func @transform_0(%arg0: i32) -> (i32, i32) {
    %c0_i32 = arith.constant 0 : i32
    %c0_i32_0 = arith.constant 0 : i32
    return %arg0, %c0_i32 : i32, i32
  }
  func.func @transform_1(%arg0: i32) -> (i32, i32) {
    %c0_i32 = arith.constant 0 : i32
    %c0_i32_0 = arith.constant 0 : i32
    %c0_i32_1 = arith.constant 0 : i32
    return %c0_i32, %c0_i32_0 : i32, i32
  }
  func.func @transform_2(%arg0: i32) -> (i32, i32) {
    %c0_i32 = arith.constant 0 : i32
    %c0_i32_0 = arith.constant 0 : i32
    %c0_i32_1 = arith.constant 0 : i32
    return %c0_i32, %c0_i32_0 : i32, i32
  }
  func.func @transform_3(%arg0: i32) -> (i32, i32) {
    %c0_i32 = arith.constant 0 : i32
    %c0_i32_0 = arith.constant 0 : i32
    %c0_i32_1 = arith.constant 0 : i32
    return %c0_i32, %c0_i32_0 : i32, i32
  }
  func.func @transform_4(%arg0: i32) -> (i32, i32) {
    %c0_i32 = arith.constant 0 : i32
    %c0_i32_0 = arith.constant 0 : i32
    %c0_i32_1 = arith.constant 0 : i32
    return %c0_i32, %c0_i32_0 : i32, i32
  }
  func.func @transform_5(%arg0: i32) -> (i32, i32) {
    %c0_i32 = arith.constant 0 : i32
    %c0_i32_0 = arith.constant 0 : i32
    %c0_i32_1 = arith.constant 0 : i32
    return %c0_i32, %c0_i32_0 : i32, i32
  }
  func.func @transform_6(%arg0: i32) -> (i32, i32) {
    %c0_i32 = arith.constant 0 : i32
    %c0_i32_0 = arith.constant 0 : i32
    %c0_i32_1 = arith.constant 0 : i32
    return %c0_i32, %c0_i32_0 : i32, i32
  }
  func.func @transform_7(%arg0: i32) -> (i32, i32) {
    %c0_i32 = arith.constant 0 : i32
    %c0_i32_0 = arith.constant 0 : i32
    %c0_i32_1 = arith.constant 0 : i32
    return %c0_i32, %c0_i32_0 : i32, i32
  }
  func.func @transform_8(%arg0: i32) -> (i32, i32) {
    %c0_i32 = arith.constant 0 : i32
    %c0_i32_0 = arith.constant 0 : i32
    %c0_i32_1 = arith.constant 0 : i32
    return %c0_i32, %c0_i32_0 : i32, i32
  }
  func.func @transform_9(%arg0: i32) -> (i32, i32) {
    %c0_i32 = arith.constant 0 : i32
    %c0_i32_0 = arith.constant 0 : i32
    %c0_i32_1 = arith.constant 0 : i32
    return %c0_i32, %c0_i32_0 : i32, i32
  }
  func.func @transform_10(%arg0: i32) -> (i32, i32) {
    %c0_i32 = arith.constant 0 : i32
    %c0_i32_0 = arith.constant 0 : i32
    %c0_i32_1 = arith.constant 0 : i32
    return %c0_i32, %c0_i32_0 : i32, i32
  }
  func.func @transform_11(%arg0: i32) -> (i32, i32) {
    %c0_i32 = arith.constant 0 : i32
    %c0_i32_0 = arith.constant 0 : i32
    %c0_i32_1 = arith.constant 0 : i32
    return %c0_i32, %c0_i32_0 : i32, i32
  }
  func.func @transform_12(%arg0: i32) -> (i32, i32) {
    %c0_i32 = arith.constant 0 : i32
    %c0_i32_0 = arith.constant 0 : i32
    %c0_i32_1 = arith.constant 0 : i32
    return %c0_i32, %c0_i32_0 : i32, i32
  }
  func.func @transform_13(%arg0: i32) -> (i32, i32) {
    %c0_i32 = arith.constant 0 : i32
    %c0_i32_0 = arith.constant 0 : i32
    %c0_i32_1 = arith.constant 0 : i32
    return %c0_i32, %c0_i32_0 : i32, i32
  }
  func.func @transform_14(%arg0: i32) -> (i32, i32) {
    %c0_i32 = arith.constant 0 : i32
    %c0_i32_0 = arith.constant 0 : i32
    %c0_i32_1 = arith.constant 0 : i32
    return %c0_i32, %c0_i32_0 : i32, i32
  }
  func.func @transform_15(%arg0: i32) -> (i32, i32) {
    %c0_i32 = arith.constant 0 : i32
    %c0_i32_0 = arith.constant 0 : i32
    return %arg0, %c0_i32 : i32, i32
  }
}

</mosaic_0001>

<llo_original>
// kernel: tpu_custom_call.1
$region0: #{tpu_custom_call.1}
  #allocation0 [shape = 'u32[]', space=smem, size = 0x4, offset = 0x4, fixed_abs, tag = 'smem constant byte address 0x4 - core index']
  #allocation1 [shape = 'u32[144,128]{1,0:T(1,128)}', space=vmem, size = 0x12000, scoped, tag = 'internal scratch']
  %s0 = inlined_call_operand.vmem [shape: f32[16,16], index: 0, kind: input, shape index: {}]
  %s1 = inlined_call_operand.vmem [shape: f32[24,32], index: 1, kind: input, shape index: {}]
  %s2 = inlined_call_operand.vmem [shape: f32[8,78], index: 2, kind: input, shape index: {}]
  %s3 = inlined_call_operand.vmem [shape: f32[8,78], index: 3, kind: input, shape index: {}]
  %s4 = inlined_call_operand.vmem [shape: f32[1,78], index: 4, kind: input, shape index: {}]
  %s5 = inlined_call_operand.vmem [shape: f32[1,78], index: 5, kind: input, shape index: {}]
  %s6 = inlined_call_operand.vmem [shape: f32[32,64], index: 6, kind: input, shape index: {}]
  %s7 = inlined_call_operand.vmem [shape: f32[78,64], index: 7, kind: input, shape index: {}]
  %s8 = inlined_call_operand.vmem [shape: f32[1,64], index: 8, kind: input, shape index: {}]
  %s9 = inlined_call_operand.vmem [shape: f32[64,32], index: 9, kind: input, shape index: {}]
  %s10 = inlined_call_operand.vmem [shape: f32[1,32], index: 10, kind: input, shape index: {}]
  %s11 = inlined_call_operand.vmem [shape: f32[32,32], index: 11, kind: input, shape index: {}]
  %s12 = inlined_call_operand.vmem [shape: f32[1,32], index: 12, kind: input, shape index: {}]
  %s13 = inlined_call_operand.vmem [shape: f32[32,32], index: 13, kind: input, shape index: {}]
  %s14 = inlined_call_operand.vmem [shape: f32[1,32], index: 14, kind: input, shape index: {}]
  %s15 = inlined_call_operand.hbm [shape: f32[16,32], index: 15, kind: output, shape index: {}]
  %s16 = sld [smem:[#allocation0]]
  $region93: #{tpu_custom_call.1} parent=0
    _
  %s18 = ssub.s32 1, %s16
  %s19 = scalar_select 0, %s18, %s16
  $region1: #{tpu_custom_call.1} parent=0
    #allocation2 [shape = 'u8[8192]{0}', space=vmem, size = 0x2000, scoped, tag = 'output window, operand 0']
    #allocation3 [shape = 's32[2]{0}', space=sflag, size = 0x8, scoped, tag = 'scoped memory for tpu_custom_call.1']
    %20 = vsyncpa [#allocation3], 0
    %s21 = scalar_lea.sflag [#allocation3], 1
    %22 = vsyncpa %s21, 0
    loop: start=0, step=1, limit=4
    $region2: #{tpu_custom_call.1} parent=1 // loop_pre_header
      _
    $region3: #{tpu_custom_call.1} parent=1 // loop_header
      %s24 = sphi 0, %s28
      %p25 = scmp.ge.s32.totalorder %s24, 4
      %s34 = sphi 0, %s36
      %s37 = sphi 0, %s34
      %s38 = sphi 0, %s37
      %s54 = sphi 0, %s38
      %s58 = sphi 0, %s58
      %s60 = sphi 0, %s58
      %s61 = sphi 0, %s60
      %s75 = sphi 0, %s61
      %s79 = sphi 0, %s79
      %s81 = sphi 0, %s79
      %s82 = sphi 0, %s81
      %s96 = sphi 0, %s82
      %s100 = sphi 0, %s100
      %s102 = sphi 0, %s100
      %s103 = sphi 0, %s102
      %s117 = sphi 0, %s103
      %s121 = sphi 0, %s121
      %s123 = sphi 0, %s121
      %s124 = sphi 0, %s123
      %s138 = sphi 0, %s124
      %s142 = sphi 0, %s142
      %s144 = sphi 0, %s142
      %s145 = sphi 0, %s144
      %s159 = sphi 0, %s145
      %s163 = sphi 0, %s163
      %s165 = sphi 0, %s163
      %s166 = sphi 0, %s165
      %s180 = sphi 0, %s166
      %s184 = sphi 0, %s184
      %s186 = sphi 0, %s184
      %s187 = sphi 0, %s186
      %s201 = sphi 0, %s187
      %s205 = sphi 0, %s205
      %s207 = sphi 0, %s205
      %s208 = sphi 0, %s207
      %s222 = sphi 0, %s208
      %s226 = sphi 0, %s226
      %s228 = sphi 0, %s226
      %s229 = sphi 0, %s228
      %s243 = sphi 0, %s229
      %s247 = sphi 0, %s247
      %s249 = sphi 0, %s247
      %s250 = sphi 0, %s249
      %s264 = sphi 0, %s250
      %s268 = sphi 0, %s268
      %s270 = sphi 0, %s268
      %s271 = sphi 0, %s270
      %s285 = sphi 0, %s271
      %s289 = sphi 0, %s289
      %s291 = sphi 0, %s289
      %s292 = sphi 0, %s291
      %s306 = sphi 0, %s292
      %s310 = sphi 0, %s310
      %s312 = sphi 0, %s310
      %s313 = sphi 0, %s312
      %s327 = sphi 0, %s313
      %s331 = sphi 0, %s331
      %s333 = sphi 0, %s331
      %s334 = sphi 0, %s333
      %s348 = sphi 0, %s334
      %s354 = sphi 0, %s356
      %s357 = sphi 0, %s354
      %s358 = sphi 0, %s357
      %s374 = sphi 0, %s358
    $region4: #{tpu_custom_call.1} parent=1 // loop_header_branch
      %27 = sbr.rel (%p25) target = $region8
    $region5: #{tpu_custom_call.1} parent=1 // loop_body
      %s29 = ssub.s32 %s24, 1
      %s30 = ssub.s32 %s24, 2
      %s31 = sadd.s32 %s24, 1
      %s32 = ssub.s32 %s24, %s31
      %p33 = scmp.eq.s32.totalorder %s32, 0
      %s35 = sadd.s32 %s34, 1
      %s36 = scalar_select %p33, %s34, %s35
      %p39 = pneg %p33
      %p40 = scmp.eq.s32.totalorder %s24, 1
      %p41 = por %p39, %p40
      %p42 = scmp.ne.s32.totalorder %s34, %s37
      %p43 = scmp.eq.s32.totalorder %s24, 0
      %p44 = por %p42, %p43
      %p45 = scmp.ne.s32.totalorder %s34, %s37
      %p46 = scmp.eq.s32.totalorder %s29, 1
      %p47 = por %p45, %p46
      %p48 = scmp.ne.s32.totalorder %s37, %s38
      %p49 = scmp.eq.s32.totalorder %s29, 0
      %p50 = por %p48, %p49
      %p51 = scmp.ne.s32.totalorder %s37, %s38
      %p52 = scmp.eq.s32.totalorder %s30, 1
      %p53 = por %p51, %p52
      %p55 = scmp.ne.s32.totalorder %s38, %s54
      %p56 = scmp.eq.s32.totalorder %s30, 0
      %p57 = por %p55, %p56
      %s59 = sadd.s32 %s58, 1
      %p62 = scmp.eq.s32.totalorder %s24, 1
      %p63 = scmp.ne.s32.totalorder %s58, %s60
      %p64 = scmp.eq.s32.totalorder %s24, 0
      %p65 = por %p63, %p64
      %p66 = scmp.ne.s32.totalorder %s58, %s60
      %p67 = scmp.eq.s32.totalorder %s29, 1
      %p68 = por %p66, %p67
      %p69 = scmp.ne.s32.totalorder %s60, %s61
      %p70 = scmp.eq.s32.totalorder %s29, 0
      %p71 = por %p69, %p70
      %p72 = scmp.ne.s32.totalorder %s60, %s61
      %p73 = scmp.eq.s32.totalorder %s30, 1
      %p74 = por %p72, %p73
      %p76 = scmp.ne.s32.totalorder %s61, %s75
      %p77 = scmp.eq.s32.totalorder %s30, 0
      %p78 = por %p76, %p77
      %s80 = sadd.s32 %s79, 1
      %p83 = scmp.eq.s32.totalorder %s24, 1
      %p84 = scmp.ne.s32.totalorder %s79, %s81
      %p85 = scmp.eq.s32.totalorder %s24, 0
      %p86 = por %p84, %p85
      %p87 = scmp.ne.s32.totalorder %s79, %s81
      %p88 = scmp.eq.s32.totalorder %s29, 1
      %p89 = por %p87, %p88
      %p90 = scmp.ne.s32.totalorder %s81, %s82
      %p91 = scmp.eq.s32.totalorder %s29, 0
      %p92 = por %p90, %p91
      %p93 = scmp.ne.s32.totalorder %s81, %s82
      %p94 = scmp.eq.s32.totalorder %s30, 1
      %p95 = por %p93, %p94
      %p97 = scmp.ne.s32.totalorder %s82, %s96
      %p98 = scmp.eq.s32.totalorder %s30, 0
      %p99 = por %p97, %p98
      %s101 = sadd.s32 %s100, 1
      %p104 = scmp.eq.s32.totalorder %s24, 1
      %p105 = scmp.ne.s32.totalorder %s100, %s102
      %p106 = scmp.eq.s32.totalorder %s24, 0
      %p107 = por %p105, %p106
      %p108 = scmp.ne.s32.totalorder %s100, %s102
      %p109 = scmp.eq.s32.totalorder %s29, 1
      %p110 = por %p108, %p109
      %p111 = scmp.ne.s32.totalorder %s102, %s103
      %p112 = scmp.eq.s32.totalorder %s29, 0
      %p113 = por %p111, %p112
      %p114 = scmp.ne.s32.totalorder %s102, %s103
      %p115 = scmp.eq.s32.totalorder %s30, 1
      %p116 = por %p114, %p115
      %p118 = scmp.ne.s32.totalorder %s103, %s117
      %p119 = scmp.eq.s32.totalorder %s30, 0
      %p120 = por %p118, %p119
      %s122 = sadd.s32 %s121, 1
      %p125 = scmp.eq.s32.totalorder %s24, 1
      %p126 = scmp.ne.s32.totalorder %s121, %s123
      %p127 = scmp.eq.s32.totalorder %s24, 0
      %p128 = por %p126, %p127
      %p129 = scmp.ne.s32.totalorder %s121, %s123
      %p130 = scmp.eq.s32.totalorder %s29, 1
      %p131 = por %p129, %p130
      %p132 = scmp.ne.s32.totalorder %s123, %s124
      %p133 = scmp.eq.s32.totalorder %s29, 0
      %p134 = por %p132, %p133
      %p135 = scmp.ne.s32.totalorder %s123, %s124
      %p136 = scmp.eq.s32.totalorder %s30, 1
      %p137 = por %p135, %p136
      %p139 = scmp.ne.s32.totalorder %s124, %s138
      %p140 = scmp.eq.s32.totalorder %s30, 0
      %p141 = por %p139, %p140
      %s143 = sadd.s32 %s142, 1
      %p146 = scmp.eq.s32.totalorder %s24, 1
      %p147 = scmp.ne.s32.totalorder %s142, %s144
      %p148 = scmp.eq.s32.totalorder %s24, 0
      %p149 = por %p147, %p148
      %p150 = scmp.ne.s32.totalorder %s142, %s144
      %p151 = scmp.eq.s32.totalorder %s29, 1
      %p152 = por %p150, %p151
      %p153 = scmp.ne.s32.totalorder %s144, %s145
      %p154 = scmp.eq.s32.totalorder %s29, 0
      %p155 = por %p153, %p154
      %p156 = scmp.ne.s32.totalorder %s144, %s145
      %p157 = scmp.eq.s32.totalorder %s30, 1
      %p158 = por %p156, %p157
      %p160 = scmp.ne.s32.totalorder %s145, %s159
      %p161 = scmp.eq.s32.totalorder %s30, 0
      %p162 = por %p160, %p161
      %s164 = sadd.s32 %s163, 1
      %p167 = scmp.eq.s32.totalorder %s24, 1
      %p168 = scmp.ne.s32.totalorder %s163, %s165
      %p169 = scmp.eq.s32.totalorder %s24, 0
      %p170 = por %p168, %p169
      %p171 = scmp.ne.s32.totalorder %s163, %s165
      %p172 = scmp.eq.s32.totalorder %s29, 1
      %p173 = por %p171, %p172
      %p174 = scmp.ne.s32.totalorder %s165, %s166
      %p175 = scmp.eq.s32.totalorder %s29, 0
      %p176 = por %p174, %p175
      %p177 = scmp.ne.s32.totalorder %s165, %s166
      %p178 = scmp.eq.s32.totalorder %s30, 1
      %p179 = por %p177, %p178
      %p181 = scmp.ne.s32.totalorder %s166, %s180
      %p182 = scmp.eq.s32.totalorder %s30, 0
      %p183 = por %p181, %p182
      %s185 = sadd.s32 %s184, 1
      %p188 = scmp.eq.s32.totalorder %s24, 1
      %p189 = scmp.ne.s32.totalorder %s184, %s186
      %p190 = scmp.eq.s32.totalorder %s24, 0
      %p191 = por %p189, %p190
      %p192 = scmp.ne.s32.totalorder %s184, %s186
      %p193 = scmp.eq.s32.totalorder %s29, 1
      %p194 = por %p192, %p193
      %p195 = scmp.ne.s32.totalorder %s186, %s187
      %p196 = scmp.eq.s32.totalorder %s29, 0
      %p197 = por %p195, %p196
      %p198 = scmp.ne.s32.totalorder %s186, %s187
      %p199 = scmp.eq.s32.totalorder %s30, 1
      %p200 = por %p198, %p199
      %p202 = scmp.ne.s32.totalorder %s187, %s201
      %p203 = scmp.eq.s32.totalorder %s30, 0
      %p204 = por %p202, %p203
      %s206 = sadd.s32 %s205, 1
      %p209 = scmp.eq.s32.totalorder %s24, 1
      %p210 = scmp.ne.s32.totalorder %s205, %s207
      %p211 = scmp.eq.s32.totalorder %s24, 0
      %p212 = por %p210, %p211
      %p213 = scmp.ne.s32.totalorder %s205, %s207
      %p214 = scmp.eq.s32.totalorder %s29, 1
      %p215 = por %p213, %p214
      %p216 = scmp.ne.s32.totalorder %s207, %s208
      %p217 = scmp.eq.s32.totalorder %s29, 0
      %p218 = por %p216, %p217
      %p219 = scmp.ne.s32.totalorder %s207, %s208
      %p220 = scmp.eq.s32.totalorder %s30, 1
      %p221 = por %p219, %p220
      %p223 = scmp.ne.s32.totalorder %s208, %s222
      %p224 = scmp.eq.s32.totalorder %s30, 0
      %p225 = por %p223, %p224
      %s227 = sadd.s32 %s226, 1
      %p230 = scmp.eq.s32.totalorder %s24, 1
      %p231 = scmp.ne.s32.totalorder %s226, %s228
      %p232 = scmp.eq.s32.totalorder %s24, 0
      %p233 = por %p231, %p232
      %p234 = scmp.ne.s32.totalorder %s226, %s228
      %p235 = scmp.eq.s32.totalorder %s29, 1
      %p236 = por %p234, %p235
      %p237 = scmp.ne.s32.totalorder %s228, %s229
      %p238 = scmp.eq.s32.totalorder %s29, 0
      %p239 = por %p237, %p238
      %p240 = scmp.ne.s32.totalorder %s228, %s229
      %p241 = scmp.eq.s32.totalorder %s30, 1
      %p242 = por %p240, %p241
      %p244 = scmp.ne.s32.totalorder %s229, %s243
      %p245 = scmp.eq.s32.totalorder %s30, 0
      %p246 = por %p244, %p245
      %s248 = sadd.s32 %s247, 1
      %p251 = scmp.eq.s32.totalorder %s24, 1
      %p252 = scmp.ne.s32.totalorder %s247, %s249
      %p253 = scmp.eq.s32.totalorder %s24, 0
      %p254 = por %p252, %p253
      %p255 = scmp.ne.s32.totalorder %s247, %s249
      %p256 = scmp.eq.s32.totalorder %s29, 1
      %p257 = por %p255, %p256
      %p258 = scmp.ne.s32.totalorder %s249, %s250
      %p259 = scmp.eq.s32.totalorder %s29, 0
      %p260 = por %p258, %p259
      %p261 = scmp.ne.s32.totalorder %s249, %s250
      %p262 = scmp.eq.s32.totalorder %s30, 1
      %p263 = por %p261, %p262
      %p265 = scmp.ne.s32.totalorder %s250, %s264
      %p266 = scmp.eq.s32.totalorder %s30, 0
      %p267 = por %p265, %p266
      %s269 = sadd.s32 %s268, 1
      %p272 = scmp.eq.s32.totalorder %s24, 1
      %p273 = scmp.ne.s32.totalorder %s268, %s270
      %p274 = scmp.eq.s32.totalorder %s24, 0
      %p275 = por %p273, %p274
      %p276 = scmp.ne.s32.totalorder %s268, %s270
      %p277 = scmp.eq.s32.totalorder %s29, 1
      %p278 = por %p276, %p277
      %p279 = scmp.ne.s32.totalorder %s270, %s271
      %p280 = scmp.eq.s32.totalorder %s29, 0
      %p281 = por %p279, %p280
      %p282 = scmp.ne.s32.totalorder %s270, %s271
      %p283 = scmp.eq.s32.totalorder %s30, 1
      %p284 = por %p282, %p283
      %p286 = scmp.ne.s32.totalorder %s271, %s285
      %p287 = scmp.eq.s32.totalorder %s30, 0
      %p288 = por %p286, %p287
      %s290 = sadd.s32 %s289, 1
      %p293 = scmp.eq.s32.totalorder %s24, 1
      %p294 = scmp.ne.s32.totalorder %s289, %s291
      %p295 = scmp.eq.s32.totalorder %s24, 0
      %p296 = por %p294, %p295
      %p297 = scmp.ne.s32.totalorder %s289, %s291
      %p298 = scmp.eq.s32.totalorder %s29, 1
      %p299 = por %p297, %p298
      %p300 = scmp.ne.s32.totalorder %s291, %s292
      %p301 = scmp.eq.s32.totalorder %s29, 0
      %p302 = por %p300, %p301
      %p303 = scmp.ne.s32.totalorder %s291, %s292
      %p304 = scmp.eq.s32.totalorder %s30, 1
      %p305 = por %p303, %p304
      %p307 = scmp.ne.s32.totalorder %s292, %s306
      %p308 = scmp.eq.s32.totalorder %s30, 0
      %p309 = por %p307, %p308
      %s311 = sadd.s32 %s310, 1
      %p314 = scmp.eq.s32.totalorder %s24, 1
      %p315 = scmp.ne.s32.totalorder %s310, %s312
      %p316 = scmp.eq.s32.totalorder %s24, 0
      %p317 = por %p315, %p316
      %p318 = scmp.ne.s32.totalorder %s310, %s312
      %p319 = scmp.eq.s32.totalorder %s29, 1
      %p320 = por %p318, %p319
      %p321 = scmp.ne.s32.totalorder %s312, %s313
      %p322 = scmp.eq.s32.totalorder %s29, 0
      %p323 = por %p321, %p322
      %p324 = scmp.ne.s32.totalorder %s312, %s313
      %p325 = scmp.eq.s32.totalorder %s30, 1
      %p326 = por %p324, %p325
      %p328 = scmp.ne.s32.totalorder %s313, %s327
      %p329 = scmp.eq.s32.totalorder %s30, 0
      %p330 = por %p328, %p329
      %s332 = sadd.s32 %s331, 1
      %p335 = scmp.eq.s32.totalorder %s24, 1
      %p336 = scmp.ne.s32.totalorder %s331, %s333
      %p337 = scmp.eq.s32.totalorder %s24, 0
      %p338 = por %p336, %p337
      %p339 = scmp.ne.s32.totalorder %s331, %s333
      %p340 = scmp.eq.s32.totalorder %s29, 1
      %p341 = por %p339, %p340
      %p342 = scmp.ne.s32.totalorder %s333, %s334
      %p343 = scmp.eq.s32.totalorder %s29, 0
      %p344 = por %p342, %p343
      %p345 = scmp.ne.s32.totalorder %s333, %s334
      %p346 = scmp.eq.s32.totalorder %s30, 1
      %p347 = por %p345, %p346
      %p349 = scmp.ne.s32.totalorder %s334, %s348
      %p350 = scmp.eq.s32.totalorder %s30, 0
      %p351 = por %p349, %p350
      %s352 = ssub.s32 %s24, %s31
      %p353 = scmp.eq.s32.totalorder %s352, 0
      %s355 = sadd.s32 %s354, 1
      %s356 = scalar_select %p353, %s354, %s355
      %p359 = pneg %p353
      %p360 = scmp.eq.s32.totalorder %s24, 1
      %p361 = por %p359, %p360
      %p362 = scmp.ne.s32.totalorder %s354, %s357
      %p363 = scmp.eq.s32.totalorder %s24, 0
      %p364 = por %p362, %p363
      %p365 = scmp.ne.s32.totalorder %s354, %s357
      %p366 = scmp.eq.s32.totalorder %s29, 1
      %p367 = por %p365, %p366
      %p368 = scmp.ne.s32.totalorder %s357, %s358
      %p369 = scmp.eq.s32.totalorder %s29, 0
      %p370 = por %p368, %p369
      %p371 = scmp.ne.s32.totalorder %s357, %s358
      %p372 = scmp.eq.s32.totalorder %s30, 1
      %p373 = por %p371, %p372
      %p375 = scmp.ne.s32.totalorder %s358, %s374
      %p376 = scmp.eq.s32.totalorder %s30, 0
      %p377 = por %p375, %p376
      %p378 = scmp.le.s32.totalorder 1, %s24
      %p379 = scmp.lt.s32.totalorder %s24, 3
      %p380 = pnand %p378, %p379
      %p381 = pneg %p380
      // Predicated region
      $region9: #{tpu_custom_call.1} parent=5 // pred_check
        _
      $region10: #{tpu_custom_call.1} parent=5 // pred_check_branch
        %383 = sbr.rel (%p380) target = $region12
      $region11: #{tpu_custom_call.1} parent=5 // pred_region
        %s384 = ssub.s32 %s24, 1
        // Predicated region
        $region13: #{tpu_custom_call.1} parent=11 // pred_check
          %p385 = pneg %p71
        $region14: #{tpu_custom_call.1} parent=11 // pred_check_branch
          %387 = sbr.rel (%p385) target = $region16
        $region15: #{tpu_custom_call.1} parent=11 // pred_region
          _
        $region16: #{tpu_custom_call.1} parent=11 // pred_fallthru
          _
        // Predicated region
        $region17: #{tpu_custom_call.1} parent=11 // pred_check
          %p388 = pneg %p92
        $region18: #{tpu_custom_call.1} parent=11 // pred_check_branch
          %390 = sbr.rel (%p388) target = $region20
        $region19: #{tpu_custom_call.1} parent=11 // pred_region
          _
        $region20: #{tpu_custom_call.1} parent=11 // pred_fallthru
          _
        // Predicated region
        $region21: #{tpu_custom_call.1} parent=11 // pred_check
          %p391 = pneg %p113
        $region22: #{tpu_custom_call.1} parent=11 // pred_check_branch
          %393 = sbr.rel (%p391) target = $region24
        $region23: #{tpu_custom_call.1} parent=11 // pred_region
          _
        $region24: #{tpu_custom_call.1} parent=11 // pred_fallthru
          _
        // Predicated region
        $region25: #{tpu_custom_call.1} parent=11 // pred_check
          %p394 = pneg %p134
        $region26: #{tpu_custom_call.1} parent=11 // pred_check_branch
          %396 = sbr.rel (%p394) target = $region28
        $region27: #{tpu_custom_call.1} parent=11 // pred_region
          _
        $region28: #{tpu_custom_call.1} parent=11 // pred_fallthru
          _
        // Predicated region
        $region29: #{tpu_custom_call.1} parent=11 // pred_check
          %p397 = pneg %p155
        $region30: #{tpu_custom_call.1} parent=11 // pred_check_branch
          %399 = sbr.rel (%p397) target = $region32
        $region31: #{tpu_custom_call.1} parent=11 // pred_region
          _
        $region32: #{tpu_custom_call.1} parent=11 // pred_fallthru
          _
        // Predicated region
        $region33: #{tpu_custom_call.1} parent=11 // pred_check
          %p400 = pneg %p176
        $region34: #{tpu_custom_call.1} parent=11 // pred_check_branch
          %402 = sbr.rel (%p400) target = $region36
        $region35: #{tpu_custom_call.1} parent=11 // pred_region
          _
        $region36: #{tpu_custom_call.1} parent=11 // pred_fallthru
          _
        // Predicated region
        $region37: #{tpu_custom_call.1} parent=11 // pred_check
          %p403 = pneg %p197
        $region38: #{tpu_custom_call.1} parent=11 // pred_check_branch
          %405 = sbr.rel (%p403) target = $region40
        $region39: #{tpu_custom_call.1} parent=11 // pred_region
          _
        $region40: #{tpu_custom_call.1} parent=11 // pred_fallthru
          _
        // Predicated region
        $region41: #{tpu_custom_call.1} parent=11 // pred_check
          %p406 = pneg %p218
        $region42: #{tpu_custom_call.1} parent=11 // pred_check_branch
          %408 = sbr.rel (%p406) target = $region44
        $region43: #{tpu_custom_call.1} parent=11 // pred_region
          _
        $region44: #{tpu_custom_call.1} parent=11 // pred_fallthru
          _
        // Predicated region
        $region45: #{tpu_custom_call.1} parent=11 // pred_check
          %p409 = pneg %p239
        $region46: #{tpu_custom_call.1} parent=11 // pred_check_branch
          %411 = sbr.rel (%p409) target = $region48
        $region47: #{tpu_custom_call.1} parent=11 // pred_region
          _
        $region48: #{tpu_custom_call.1} parent=11 // pred_fallthru
          _
        // Predicated region
        $region49: #{tpu_custom_call.1} parent=11 // pred_check
          %p412 = pneg %p260
        $region50: #{tpu_custom_call.1} parent=11 // pred_check_branch
          %414 = sbr.rel (%p412) target = $region52
        $region51: #{tpu_custom_call.1} parent=11 // pred_region
          _
        $region52: #{tpu_custom_call.1} parent=11 // pred_fallthru
          _
        // Predicated region
        $region53: #{tpu_custom_call.1} parent=11 // pred_check
          %p415 = pneg %p281
        $region54: #{tpu_custom_call.1} parent=11 // pred_check_branch
          %417 = sbr.rel (%p415) target = $region56
        $region55: #{tpu_custom_call.1} parent=11 // pred_region
          _
        $region56: #{tpu_custom_call.1} parent=11 // pred_fallthru
          _
        // Predicated region
        $region57: #{tpu_custom_call.1} parent=11 // pred_check
          %p418 = pneg %p302
        $region58: #{tpu_custom_call.1} parent=11 // pred_check_branch
          %420 = sbr.rel (%p418) target = $region60
        $region59: #{tpu_custom_call.1} parent=11 // pred_region
          _
        $region60: #{tpu_custom_call.1} parent=11 // pred_fallthru
          _
        // Predicated region
        $region61: #{tpu_custom_call.1} parent=11 // pred_check
          %p421 = pneg %p323
        $region62: #{tpu_custom_call.1} parent=11 // pred_check_branch
          %423 = sbr.rel (%p421) target = $region64
        $region63: #{tpu_custom_call.1} parent=11 // pred_region
          _
        $region64: #{tpu_custom_call.1} parent=11 // pred_fallthru
          _
        // Predicated region
        $region65: #{tpu_custom_call.1} parent=11 // pred_check
          %p424 = pneg %p344
        $region66: #{tpu_custom_call.1} parent=11 // pred_check_branch
          %426 = sbr.rel (%p424) target = $region68
        $region67: #{tpu_custom_call.1} parent=11 // pred_region
          _
        $region68: #{tpu_custom_call.1} parent=11 // pred_fallthru
          _
      $region12: #{tpu_custom_call.1} parent=5 // pred_fallthru
        _
      %p427 = scmp.lt.s32.totalorder %s24, 2
      // Predicated region
      $region69: #{tpu_custom_call.1} parent=5 // pred_check
        %p428 = pneg %p427
      $region70: #{tpu_custom_call.1} parent=5 // pred_check_branch
        %430 = sbr.rel (%p428) target = $region72
      $region71: #{tpu_custom_call.1} parent=5 // pred_region
        // Predicated region
        $region73: #{tpu_custom_call.1} parent=71 // pred_check
          %p431 = pneg %p44
        $region74: #{tpu_custom_call.1} parent=71 // pred_check_branch
          %433 = sbr.rel (%p431) target = $region76
        $region75: #{tpu_custom_call.1} parent=71 // pred_region
          %p434 = scmp.lt.s32.totalorder %s24, 1
          %s435 = scalar_select %p434, %s24, 1
          %s436 = smul.addr %s435, 8
          %s437 = scalar_lea.vmem %s0, %s436
        $region76: #{tpu_custom_call.1} parent=71 // pred_fallthru
          _
      $region72: #{tpu_custom_call.1} parent=5 // pred_fallthru
        _
      %p438 = scmp.le.s32.totalorder 1, %s24
      %p439 = scmp.lt.s32.totalorder %s24, 3
      %p440 = pnand %p438, %p439
      %p441 = pneg %p440
      // Predicated region
      $region77: #{tpu_custom_call.1} parent=5 // pred_check
        _
      $region78: #{tpu_custom_call.1} parent=5 // pred_check_branch
        %443 = sbr.rel (%p440) target = $region80
      $region79: #{tpu_custom_call.1} parent=5 // pred_region
        %s444 = ssub.s32 %s24, 1
        %p445 = scmp.lt.s32.totalorder %s29, 1
        %s446 = scalar_select %p445, %s29, 1
        %s447 = smul.addr %s446, 8
        %s448 = scalar_lea.vmem %s0, %s447
        %p449 = pneg %p50
        %p450 = pneg %p47
        %p451 = pneg %p71
        %p452 = pneg %p68
        %p453 = pneg %p92
        %p454 = pneg %p89
        %p455 = pneg %p113
        %p456 = pneg %p110
        %p457 = pneg %p134
        %p458 = pneg %p131
        %p459 = pneg %p155
        %p460 = pneg %p152
        %p461 = pneg %p176
        %p462 = pneg %p173
        %p463 = pneg %p197
        %p464 = pneg %p194
        %p465 = pneg %p218
        %p466 = pneg %p215
        %p467 = pneg %p239
        %p468 = pneg %p236
        %p469 = pneg %p260
        %p470 = pneg %p257
        %p471 = pneg %p281
        %p472 = pneg %p278
        %p473 = pneg %p302
        %p474 = pneg %p299
        %p475 = pneg %p323
        %p476 = pneg %p320
        %p477 = pneg %p344
        %p478 = pneg %p341
        %p479 = pneg %p370
        %p480 = pneg %p367
        %s481 = sand.u32 %s357, 1
        %s482 = scalar_lea.sflag [#allocation3], %s481
        %s483 = sand.u32 %s357, 1
        %s484 = smul.addr %s483, 8
        %s485 = scalar_lea.vmem [#allocation2], %s484
        %p486 = scmp.lt.s32.totalorder %s29, 1
        %s487 = scalar_select %p486, %s29, 1
        %s488 = smul.addr %s487, 8
        %s489 = scalar_lea.vmem %s0, %s488
        %v490 = vld [vmem:[%s489] sm:$0xff]
        %v491 = vcvt.f32.s32.to.zero.pseudo %v490
        %v492 = vlaneseq
        %v493 = vand.u32 %v492, 127
        %494 = vset.pattern.permute.xlu0 0
        %495 = vperm.xlu0 %494, %v491
        %v496 = vpop.permute.xlu0 %495
        %vm497 = vcmp.eq.s32.totalorder %v493, %v496
        %v498 = vsel %vm497, 1, 0
        %v499 = vcvt.s32.f32 %v498
        %v500 = vld [vmem:[%s1] sm:$0xff]
        %v501 = vld [vmem:[%s1 + $0x8] sm:$0xff]
        %v502 = vld [vmem:[%s1 + $0x10] sm:$0xff]
        %vm503 = vcmask 195584
        %v505 = vsel %vm503, %v499, 0
        %507 = vmatprep.subr.mxu0 0.0
        %508 = vmatpush1.msra.mxu0 %v500
        %509 = vmatprep.subr.mxu0 0.0
        %510 = vmatpush1.msra.mxu0 %v501
        %511 = vmatprep.subr.mxu0 0.0
        %512 = vmatpush1.msra.mxu0 %v502
        %513 = vmatprep.subr.mxu0 0.0
        %514 = vmatpush1.msra.mxu0 0.0
        %515 = vmatprep.subr.mxu0 0.0
        %516 = vmatpush1.msra.mxu0 0.0
        %517 = vmatprep.subr.mxu0 0.0
        %518 = vmatpush1.msra.mxu0 0.0
        %519 = vmatprep.subr.mxu0 0.0
        %520 = vmatpush1.msra.mxu0 0.0
        %521 = vmatprep.subr.mxu0 0.0
        %522 = vmatpush1.msra.mxu0 0.0
        %523 = vmatprep.subr.mxu0 0.0
        %524 = vmatpush1.msra.mxu0 0.0
        %525 = vmatprep.subr.mxu0 0.0
        %526 = vmatpush1.msra.mxu0 0.0
        %527 = vmatprep.subr.mxu0 0.0
        %528 = vmatpush1.msra.mxu0 0.0
        %529 = vmatprep.subr.mxu0 0.0
        %530 = vmatpush1.msra.mxu0 0.0
        %531 = vmatprep.subr.mxu0 0.0
        %532 = vmatpush1.msra.mxu0 0.0
        %533 = vmatprep.subr.mxu0 0.0
        %534 = vmatpush1.msra.mxu0 0.0
        %535 = vmatprep.subr.mxu0 0.0
        %536 = vmatpush1.msra.mxu0 0.0
        %537 = vmatprep.subr.mxu0 0.0
        %538 = vmatpush1.msra.mxu0 0.0
        %539 = vmatprep.subr.mxu0 0.0
        %540 = vmatpush1.msra.mxu0 0.0
        %541 = vmatprep.subr.mxu0 0.0
        %542 = vmatpush1.msra.mxu0 0.0
        %543 = vmatprep.subr.mxu0 0.0
        %544 = vmatpush1.msra.mxu0 0.0
        %545 = vmatprep.subr.mxu0 0.0
        %546 = vmatpush1.msra.mxu0 0.0
        %547 = vmatprep.subr.mxu0 0.0
        %548 = vmatpush1.msra.mxu0 0.0
        %549 = vmatprep.subr.mxu0 0.0
        %550 = vmatpush1.msra.mxu0 0.0
        %551 = vmatprep.subr.mxu0 0.0
        %552 = vmatpush1.msra.mxu0 0.0
        %553 = vmatprep.subr.mxu0 0.0
        %554 = vmatpush1.msra.mxu0 0.0
        %555 = vmatprep.subr.mxu0 0.0
        %556 = vmatpush1.msra.mxu0 0.0
        %557 = vmatprep.subr.mxu0 0.0
        %558 = vmatpush1.msra.mxu0 0.0
        %559 = vmatprep.subr.mxu0 0.0
        %560 = vmatpush1.msra.mxu0 0.0
        %561 = vmatprep.subr.mxu0 0.0
        %562 = vmatpush1.msra.mxu0 0.0
        %563 = vmatprep.subr.mxu0 0.0
        %564 = vmatpush1.msra.mxu0 0.0
        %565 = vmatprep.subr.mxu0 0.0
        %566 = vmatpush1.msra.mxu0 0.0
        %567 = vmatprep.subr.mxu0 0.0
        %568 = vmatpush1.msra.mxu0 0.0
        %569 = vmatprep.subr.mxu0 0.0
        %570 = vmatpush1.msra.mxu0 0.0
        %571 = vmatprep.mubr.f32.mxu0 0.0
        %572 = vmatmul.mubr.f32.gmra.mrb[0].mxu0 %v505
        %v573 = vpop.f32.mrb[0].mxu0
        %v574 = vadd.f32 0.0, %v573
        %v575 = vpop.f32.mrb[0].mxu0
        %576 = vdwg.mxu0
        %v577 = vld [vmem:[%s2] sm:$0xff]
        %579 = vrot.lane.b32.xlu0 %v490, 127
        %v580 = vpop.permute.xlu0 %579
        %vm581 = vcmask 64512
        %v582 = vsel %vm581, %v580, 0
        %584 = vmatprep.subr.mxu0 0.0
        %585 = vmatpush1.msra.mxu0 %v577
        %586 = vmatprep.subr.mxu0 0.0
        %587 = vmatpush1.msra.mxu0 0.0
        %588 = vmatprep.subr.mxu0 0.0
        %589 = vmatpush1.msra.mxu0 0.0
        %590 = vmatprep.subr.mxu0 0.0
        %591 = vmatpush1.msra.mxu0 0.0
        %592 = vmatprep.subr.mxu0 0.0
        %593 = vmatpush1.msra.mxu0 0.0
        %594 = vmatprep.subr.mxu0 0.0
        %595 = vmatpush1.msra.mxu0 0.0
        %596 = vmatprep.subr.mxu0 0.0
        %597 = vmatpush1.msra.mxu0 0.0
        %598 = vmatprep.subr.mxu0 0.0
        %599 = vmatpush1.msra.mxu0 0.0
        %600 = vmatprep.subr.mxu0 0.0
        %601 = vmatpush1.msra.mxu0 0.0
        %602 = vmatprep.subr.mxu0 0.0
        %603 = vmatpush1.msra.mxu0 0.0
        %604 = vmatprep.subr.mxu0 0.0
        %605 = vmatpush1.msra.mxu0 0.0
        %606 = vmatprep.subr.mxu0 0.0
        %607 = vmatpush1.msra.mxu0 0.0
        %608 = vmatprep.subr.mxu0 0.0
        %609 = vmatpush1.msra.mxu0 0.0
        %610 = vmatprep.subr.mxu0 0.0
        %611 = vmatpush1.msra.mxu0 0.0
        %612 = vmatprep.subr.mxu0 0.0
        %613 = vmatpush1.msra.mxu0 0.0
        %614 = vmatprep.subr.mxu0 0.0
        %615 = vmatpush1.msra.mxu0 0.0
        %616 = vmatprep.subr.mxu0 0.0
        %617 = vmatpush1.msra.mxu0 0.0
        %618 = vmatprep.subr.mxu0 0.0
        %619 = vmatpush1.msra.mxu0 0.0
        %620 = vmatprep.subr.mxu0 0.0
        %621 = vmatpush1.msra.mxu0 0.0
        %622 = vmatprep.subr.mxu0 0.0
        %623 = vmatpush1.msra.mxu0 0.0
        %624 = vmatprep.subr.mxu0 0.0
        %625 = vmatpush1.msra.mxu0 0.0
        %626 = vmatprep.subr.mxu0 0.0
        %627 = vmatpush1.msra.mxu0 0.0
        %628 = vmatprep.subr.mxu0 0.0
        %629 = vmatpush1.msra.mxu0 0.0
        %630 = vmatprep.subr.mxu0 0.0
        %631 = vmatpush1.msra.mxu0 0.0
        %632 = vmatprep.subr.mxu0 0.0
        %633 = vmatpush1.msra.mxu0 0.0
        %634 = vmatprep.subr.mxu0 0.0
        %635 = vmatpush1.msra.mxu0 0.0
        %636 = vmatprep.subr.mxu0 0.0
        %637 = vmatpush1.msra.mxu0 0.0
        %638 = vmatprep.subr.mxu0 0.0
        %639 = vmatpush1.msra.mxu0 0.0
        %640 = vmatprep.subr.mxu0 0.0
        %641 = vmatpush1.msra.mxu0 0.0
        %642 = vmatprep.subr.mxu0 0.0
        %643 = vmatpush1.msra.mxu0 0.0
        %644 = vmatprep.subr.mxu0 0.0
        %645 = vmatpush1.msra.mxu0 0.0
        %646 = vmatprep.subr.mxu0 0.0
        %647 = vmatpush1.msra.mxu0 0.0
        %648 = vmatprep.mubr.f32.mxu0 0.0
        %649 = vmatmul.mubr.f32.gmra.mrb[0].mxu0 %v582
        %v650 = vpop.f32.mrb[0].mxu0
        %v651 = vadd.f32 0.0, %v650
        %v652 = vpop.f32.mrb[0].mxu0
        %653 = vdwg.mxu0
        %v654 = vld [vmem:[%s3] sm:$0xff]
        %655 = vrot.lane.b32.xlu0 %v490, 121
        %v656 = vpop.permute.xlu0 %655
        %v657 = vsel %vm581, %v656, 0
        %659 = vmatprep.subr.mxu0 0.0
        %660 = vmatpush1.msra.mxu0 %v654
        %661 = vmatprep.subr.mxu0 0.0
        %662 = vmatpush1.msra.mxu0 0.0
        %663 = vmatprep.subr.mxu0 0.0
        %664 = vmatpush1.msra.mxu0 0.0
        %665 = vmatprep.subr.mxu0 0.0
        %666 = vmatpush1.msra.mxu0 0.0
        %667 = vmatprep.subr.mxu0 0.0
        %668 = vmatpush1.msra.mxu0 0.0
        %669 = vmatprep.subr.mxu0 0.0
        %670 = vmatpush1.msra.mxu0 0.0
        %671 = vmatprep.subr.mxu0 0.0
        %672 = vmatpush1.msra.mxu0 0.0
        %673 = vmatprep.subr.mxu0 0.0
        %674 = vmatpush1.msra.mxu0 0.0
        %675 = vmatprep.subr.mxu0 0.0
        %676 = vmatpush1.msra.mxu0 0.0
        %677 = vmatprep.subr.mxu0 0.0
        %678 = vmatpush1.msra.mxu0 0.0
        %679 = vmatprep.subr.mxu0 0.0
        %680 = vmatpush1.msra.mxu0 0.0
        %681 = vmatprep.subr.mxu0 0.0
        %682 = vmatpush1.msra.mxu0 0.0
        %683 = vmatprep.subr.mxu0 0.0
        %684 = vmatpush1.msra.mxu0 0.0
        %685 = vmatprep.subr.mxu0 0.0
        %686 = vmatpush1.msra.mxu0 0.0
        %687 = vmatprep.subr.mxu0 0.0
        %688 = vmatpush1.msra.mxu0 0.0
        %689 = vmatprep.subr.mxu0 0.0
        %690 = vmatpush1.msra.mxu0 0.0
        %691 = vmatprep.subr.mxu0 0.0
        %692 = vmatpush1.msra.mxu0 0.0
        %693 = vmatprep.subr.mxu0 0.0
        %694 = vmatpush1.msra.mxu0 0.0
        %695 = vmatprep.subr.mxu0 0.0
        %696 = vmatpush1.msra.mxu0 0.0
        %697 = vmatprep.subr.mxu0 0.0
        %698 = vmatpush1.msra.mxu0 0.0
        %699 = vmatprep.subr.mxu0 0.0
        %700 = vmatpush1.msra.mxu0 0.0
        %701 = vmatprep.subr.mxu0 0.0
        %702 = vmatpush1.msra.mxu0 0.0
        %703 = vmatprep.subr.mxu0 0.0
        %704 = vmatpush1.msra.mxu0 0.0
        %705 = vmatprep.subr.mxu0 0.0
        %706 = vmatpush1.msra.mxu0 0.0
        %707 = vmatprep.subr.mxu0 0.0
        %708 = vmatpush1.msra.mxu0 0.0
        %709 = vmatprep.subr.mxu0 0.0
        %710 = vmatpush1.msra.mxu0 0.0
        %711 = vmatprep.subr.mxu0 0.0
        %712 = vmatpush1.msra.mxu0 0.0
        %713 = vmatprep.subr.mxu0 0.0
        %714 = vmatpush1.msra.mxu0 0.0
        %715 = vmatprep.subr.mxu0 0.0
        %716 = vmatpush1.msra.mxu0 0.0
        %717 = vmatprep.subr.mxu0 0.0
        %718 = vmatpush1.msra.mxu0 0.0
        %719 = vmatprep.subr.mxu0 0.0
        %720 = vmatpush1.msra.mxu0 0.0
        %721 = vmatprep.subr.mxu0 0.0
        %722 = vmatpush1.msra.mxu0 0.0
        %723 = vmatprep.mubr.f32.mxu0 0.0
        %724 = vmatmul.mubr.f32.gmra.mrb[0].mxu0 %v657
        %v725 = vpop.f32.mrb[0].mxu0
        %v726 = vadd.f32 0.0, %v725
        %v727 = vpop.f32.mrb[0].mxu0
        %728 = vdwg.mxu0
        %v729 = vld [vmem:[%s4] sm:$0x1]
        %v731 = vlaneseq
        %v732 = vshrl.u32 %v731, 7
        %v733 = vsub.s32 0, %v732
        %v734 = vrot.slane %v729, %v733
        %v736 = vadd.f32 %v651, %v734
        %v737 = vand.u32 2147483647, %v736
        %vm738 = vcmp.le.f32.partialorder %v737, 0.7853982
        %vm739 = vcmp.lt.s32.totalorder %v736, 0
        %v740 = vand.u32 %v736, 2139095040
        %v741 = vshrl.u32 %v740, 23
        %v742 = vsub.s32 %v741, 127
        %v743 = vand.u32 2147483647, %v736
        %v744 = vand.u32 %v743, 8388607
        %v745 = vor.u32 %v744, 8388608
        %v746 = vsub.s32 0, %v745
        %v747 = vadd.s32 %v742, 1
        %vm748 = vcmp.gt.s32.totalorder %v747, 0
        %v749 = vsel %vm748, %v747, 0
        %v750 = vshrl.u32 %v749, 5
        %v751 = vand.u32 %v749, 31
        %v752 = vsub.s32 32, %v751
        %v753 = vshrl.u32 683565275, %v752
        %v754 = vshll.u32 683565275, %v751
        %v755 = vshrl.u32 2475754826, %v752
        %v756 = vor.u32 %v754, %v755
        %v757 = vshll.u32 2475754826, %v751
        %v758 = vshrl.u32 2131351028, %v752
        %v759 = vor.u32 %v757, %v758
        %v760 = vshll.u32 2131351028, %v751
        %v761 = vshrl.u32 2102212464, %v752
        %v762 = vor.u32 %v760, %v761
        %v763 = vshll.u32 2102212464, %v751
        %v764 = vshrl.u32 920167782, %v752
        %v765 = vor.u32 %v763, %v764
        %v766 = vshll.u32 920167782, %v751
        %v767 = vshrl.u32 1326507024, %v752
        %v768 = vor.u32 %v766, %v767
        %vm769 = vcmp.lt.s32.totalorder %v750, 1
        %vm770 = vcmp.lt.s32.totalorder %v750, 2
        %vm771 = vcmp.lt.s32.totalorder %v750, 3
        %vm772 = vcmp.lt.s32.totalorder %v750, 4
        %v773 = vsel %vm769, %v753, %v756
        %v774 = vsel %vm772, %v762, 2102212464
        %v775 = vsel %vm771, %v759, %v774
        %v776 = vsel %vm770, %v773, %v775
        %v777 = vsel %vm769, %v756, %v759
        %v778 = vsel %vm772, %v765, 920167782
        %v779 = vsel %vm771, %v762, %v778
        %v780 = vsel %vm770, %v777, %v779
        %v781 = vsel %vm769, %v759, %v762
        %v782 = vsel %vm772, %v768, 1326507024
        %v783 = vsel %vm771, %v765, %v782
        %v784 = vsel %vm770, %v781, %v783
        %v785 = vshll.u32 %v745, 8
        %v786 = vmul.u32.u64.compose %v785, %v784
        %v787 = vextract.low.u32 %v786
        %v788 = vextract.high.u32 %v786
        %v789 = vmul.u32.u64.compose %v785, %v780
        %v790 = vextract.low.u32 %v789
        %v791 = vextract.high.u32 %v789
        %v792 = vmul.u32 %v785, %v776
        %v793 = vadd.s32 %v788, %v790
        %vm794 = vc.u32 %v788, %v790
        %v795 = vadd.s32 %v791, 1
        %v796 = vsel %vm794, %v795, %v791
        %v797 = vadd.s32 %v792, %v796
        %v798 = vadd.s32 %v797, 536870912
        %v799 = vshrl.u32 %v798, 30
        %v800 = vshll.u32 %v799, 30
        %v801 = vsub.s32 %v797, %v800
        %vm802 = vcmp.lt.s32.totalorder %v801, 0
        %v803 = vsub.s32 0, %v801
        %v804 = vsel %vm802, %v803, %v801
        %v805 = vclz %v804
        %v806 = vsub.s32 %v805, 2
        %vm807 = vcmp.gt.s32.totalorder 0, %v806
        %v808 = vsel %vm807, 0, %v806
        %v809 = vsub.s32 32, %v808
        %v810 = vshll.u32 %v801, %v808
        %v811 = vshrl.u32 %v793, %v809
        %v812 = vor.u32 %v810, %v811
        %v813 = vsub.s32 4294967266, %v808
        %v814 = vadd.s32 %v813, 127
        %v815 = vshll.u32 %v814, 23
        %v816 = vor.u32 4788187, %v815
        %v817 = vand.u32 2147483647, %v816
        %v819 = vcvt.s32.f32 %v812
        %v820 = vmul.f32 %v819, %v817
        %v821 = vxor.u32 %v820, 2147483648
        %v822 = vsel %vm739, %v821, %v820
        %v823 = vsub.s32 4, %v799
        %v824 = vsel %vm739, %v823, %v799
        %v825 = vsel %vm738, %v736, %v822
        %v826 = vsel %vm738, 0, %v824
        %v827 = vcosq.f32.pop %v825
        %v828 = vsinq.f32.pop %v825
        %vm829 = vweird.f32 %v736
        %v830 = vadd.s32 %v826, 3
        %v831 = vand.u32 %v830, 3
        %vm832 = vcmp.lt.s32.totalorder %v831, 2
        %vm833 = vcmp.eq.s32.totalorder %v831, 0
        %v834 = vxor.u32 %v828, 2147483648
        %v835 = vsel %vm833, %v827, %v834
        %vm836 = vcmp.eq.s32.totalorder %v831, 2
        %v837 = vxor.u32 %v827, 2147483648
        %v838 = vsel %vm836, %v837, %v828
        %v839 = vsel %vm832, %v835, %v838
        %v840 = vsel %vm829, nan, %v839
        %v841 = vld [vmem:[%s5] sm:$0x1]
        %v843 = vlaneseq
        %v844 = vshrl.u32 %v843, 7
        %v845 = vsub.s32 0, %v844
        %v846 = vrot.slane %v841, %v845
        %v848 = vmul.f32 %v651, %v846
        %v849 = vsub.f32 1.0, %v841
        %v851 = vlaneseq
        %v852 = vshrl.u32 %v851, 7
        %v853 = vsub.s32 0, %v852
        %v854 = vrot.slane %v849, %v853
        %v856 = vmul.f32 %v840, %v854
        %v857 = vadd.f32 %v848, %v856
        %v858 = vmul.f32 %v857, %v726
        %v859 = vld [vmem:[%s6] sm:$0xff]
        %v860 = vld [vmem:[%s6 + $0x8] sm:$0xff]
        %v861 = vld [vmem:[%s6 + $0x10] sm:$0xff]
        %v862 = vld [vmem:[%s6 + $0x18] sm:$0xff]
        %v863 = vld [vmem:[%s7] sm:$0xff]
        %v864 = vld [vmem:[%s7 + $0x8] sm:$0xff]
        %v865 = vld [vmem:[%s7 + $0x10] sm:$0xff]
        %v866 = vld [vmem:[%s7 + $0x18] sm:$0xff]
        %v867 = vld [vmem:[%s7 + $0x20] sm:$0xff]
        %v868 = vld [vmem:[%s7 + $0x28] sm:$0xff]
        %v869 = vld [vmem:[%s7 + $0x30] sm:$0xff]
        %v870 = vld [vmem:[%s7 + $0x38] sm:$0xff]
        %v871 = vld [vmem:[%s7 + $0x40] sm:$0xff]
        %v872 = vld [vmem:[%s7 + $0x48] sm:$0x3f]
        %vm873 = vcmask 637952
        %v875 = vsel %vm873, %v858, 0
        %vm877 = vcmask 1045504
        %v879 = vsel %vm877, %v872, 0
        %881 = vmatprep.subr.mxu0 0.0
        %882 = vmatpush1.msra.mxu0 %v863
        %883 = vmatprep.subr.mxu0 0.0
        %884 = vmatpush1.msra.mxu0 %v864
        %885 = vmatprep.subr.mxu0 0.0
        %886 = vmatpush1.msra.mxu0 %v865
        %887 = vmatprep.subr.mxu0 0.0
        %888 = vmatpush1.msra.mxu0 %v866
        %889 = vmatprep.subr.mxu0 0.0
        %890 = vmatpush1.msra.mxu0 %v867
        %891 = vmatprep.subr.mxu0 0.0
        %892 = vmatpush1.msra.mxu0 %v868
        %893 = vmatprep.subr.mxu0 0.0
        %894 = vmatpush1.msra.mxu0 %v869
        %895 = vmatprep.subr.mxu0 0.0
        %896 = vmatpush1.msra.mxu0 %v870
        %897 = vmatprep.subr.mxu0 0.0
        %898 = vmatpush1.msra.mxu0 %v871
        %899 = vmatprep.subr.mxu0 0.0
        %900 = vmatpush1.msra.mxu0 %v879
        %901 = vmatprep.subr.mxu0 0.0
        %902 = vmatpush1.msra.mxu0 0.0
        %903 = vmatprep.subr.mxu0 0.0
        %904 = vmatpush1.msra.mxu0 0.0
        %905 = vmatprep.subr.mxu0 0.0
        %906 = vmatpush1.msra.mxu0 0.0
        %907 = vmatprep.subr.mxu0 0.0
        %908 = vmatpush1.msra.mxu0 0.0
        %909 = vmatprep.subr.mxu0 0.0
        %910 = vmatpush1.msra.mxu0 0.0
        %911 = vmatprep.subr.mxu0 0.0
        %912 = vmatpush1.msra.mxu0 0.0
        %913 = vmatprep.subr.mxu0 0.0
        %914 = vmatpush1.msra.mxu0 0.0
        %915 = vmatprep.subr.mxu0 0.0
        %916 = vmatpush1.msra.mxu0 0.0
        %917 = vmatprep.subr.mxu0 0.0
        %918 = vmatpush1.msra.mxu0 0.0
        %919 = vmatprep.subr.mxu0 0.0
        %920 = vmatpush1.msra.mxu0 0.0
        %921 = vmatprep.subr.mxu0 0.0
        %922 = vmatpush1.msra.mxu0 0.0
        %923 = vmatprep.subr.mxu0 0.0
        %924 = vmatpush1.msra.mxu0 0.0
        %925 = vmatprep.subr.mxu0 0.0
        %926 = vmatpush1.msra.mxu0 0.0
        %927 = vmatprep.subr.mxu0 0.0
        %928 = vmatpush1.msra.mxu0 0.0
        %929 = vmatprep.subr.mxu0 0.0
        %930 = vmatpush1.msra.mxu0 0.0
        %931 = vmatprep.subr.mxu0 0.0
        %932 = vmatpush1.msra.mxu0 0.0
        %933 = vmatprep.subr.mxu0 0.0
        %934 = vmatpush1.msra.mxu0 0.0
        %935 = vmatprep.subr.mxu0 0.0
        %936 = vmatpush1.msra.mxu0 0.0
        %937 = vmatprep.subr.mxu0 0.0
        %938 = vmatpush1.msra.mxu0 0.0
        %939 = vmatprep.subr.mxu0 0.0
        %940 = vmatpush1.msra.mxu0 0.0
        %941 = vmatprep.subr.mxu0 0.0
        %942 = vmatpush1.msra.mxu0 0.0
        %943 = vmatprep.subr.mxu0 0.0
        %944 = vmatpush1.msra.mxu0 0.0
        %945 = vmatprep.mubr.f32.mxu0 0.0
        %946 = vmatmul.mubr.f32.gmra.mrb[0].mxu0 %v875
        %v947 = vpop.f32.mrb[0].mxu0
        %v948 = vadd.f32 0.0, %v947
        %v949 = vpop.f32.mrb[0].mxu0
        %950 = vdwg.mxu0
        %vm951 = vcmask 261120
        %v953 = vsel %vm951, %v574, 0
        %955 = vmatprep.subr.mxu0 0.0
        %956 = vmatpush1.msra.mxu0 %v859
        %957 = vmatprep.subr.mxu0 0.0
        %958 = vmatpush1.msra.mxu0 %v860
        %959 = vmatprep.subr.mxu0 0.0
        %960 = vmatpush1.msra.mxu0 %v861
        %961 = vmatprep.subr.mxu0 0.0
        %962 = vmatpush1.msra.mxu0 %v862
        %963 = vmatprep.subr.mxu0 0.0
        %964 = vmatpush1.msra.mxu0 0.0
        %965 = vmatprep.subr.mxu0 0.0
        %966 = vmatpush1.msra.mxu0 0.0
        %967 = vmatprep.subr.mxu0 0.0
        %968 = vmatpush1.msra.mxu0 0.0
        %969 = vmatprep.subr.mxu0 0.0
        %970 = vmatpush1.msra.mxu0 0.0
        %971 = vmatprep.subr.mxu0 0.0
        %972 = vmatpush1.msra.mxu0 0.0
        %973 = vmatprep.subr.mxu0 0.0
        %974 = vmatpush1.msra.mxu0 0.0
        %975 = vmatprep.subr.mxu0 0.0
        %976 = vmatpush1.msra.mxu0 0.0
        %977 = vmatprep.subr.mxu0 0.0
        %978 = vmatpush1.msra.mxu0 0.0
        %979 = vmatprep.subr.mxu0 0.0
        %980 = vmatpush1.msra.mxu0 0.0
        %981 = vmatprep.subr.mxu0 0.0
        %982 = vmatpush1.msra.mxu0 0.0
        %983 = vmatprep.subr.mxu0 0.0
        %984 = vmatpush1.msra.mxu0 0.0
        %985 = vmatprep.subr.mxu0 0.0
        %986 = vmatpush1.msra.mxu0 0.0
        %987 = vmatprep.subr.mxu0 0.0
        %988 = vmatpush1.msra.mxu0 0.0
        %989 = vmatprep.subr.mxu0 0.0
        %990 = vmatpush1.msra.mxu0 0.0
        %991 = vmatprep.subr.mxu0 0.0
        %992 = vmatpush1.msra.mxu0 0.0
        %993 = vmatprep.subr.mxu0 0.0
        %994 = vmatpush1.msra.mxu0 0.0
        %995 = vmatprep.subr.mxu0 0.0
        %996 = vmatpush1.msra.mxu0 0.0
        %997 = vmatprep.subr.mxu0 0.0
        %998 = vmatpush1.msra.mxu0 0.0
        %999 = vmatprep.subr.mxu0 0.0
        %1000 = vmatpush1.msra.mxu0 0.0
        %1001 = vmatprep.subr.mxu0 0.0
        %1002 = vmatpush1.msra.mxu0 0.0
        %1003 = vmatprep.subr.mxu0 0.0
        %1004 = vmatpush1.msra.mxu0 0.0
        %1005 = vmatprep.subr.mxu0 0.0
        %1006 = vmatpush1.msra.mxu0 0.0
        %1007 = vmatprep.subr.mxu0 0.0
        %1008 = vmatpush1.msra.mxu0 0.0
        %1009 = vmatprep.subr.mxu0 0.0
        %1010 = vmatpush1.msra.mxu0 0.0
        %1011 = vmatprep.subr.mxu0 0.0
        %1012 = vmatpush1.msra.mxu0 0.0
        %1013 = vmatprep.subr.mxu0 0.0
        %1014 = vmatpush1.msra.mxu0 0.0
        %1015 = vmatprep.subr.mxu0 0.0
        %1016 = vmatpush1.msra.mxu0 0.0
        %1017 = vmatprep.subr.mxu0 0.0
        %1018 = vmatpush1.msra.mxu0 0.0
        %1019 = vmatprep.mubr.f32.mxu0 0.0
        %1020 = vmatmul.mubr.f32.gmra.mrb[0].mxu0 %v953
        %v1021 = vpop.f32.mrb[0].mxu0
        %v1022 = vadd.f32 %v948, %v1021
        %v1023 = vpop.f32.mrb[0].mxu0
        %1024 = vdwg.mxu0
        %v1025 = vld [vmem:[%s8] sm:$0x1]
        %v1027 = vlaneseq
        %v1028 = vshrl.u32 %v1027, 7
        %v1029 = vsub.s32 0, %v1028
        %v1030 = vrot.slane %v1025, %v1029
        %v1032 = vadd.f32 %v1022, %v1030
        %v1033 = vmax.f32 %v1032, 0.0
        %v1034 = vld [vmem:[%s9] sm:$0xff]
        %v1035 = vld [vmem:[%s9 + $0x8] sm:$0xff]
        %v1036 = vld [vmem:[%s9 + $0x10] sm:$0xff]
        %v1037 = vld [vmem:[%s9 + $0x18] sm:$0xff]
        %v1038 = vld [vmem:[%s9 + $0x20] sm:$0xff]
        %v1039 = vld [vmem:[%s9 + $0x28] sm:$0xff]
        %v1040 = vld [vmem:[%s9 + $0x30] sm:$0xff]
        %v1041 = vld [vmem:[%s9 + $0x38] sm:$0xff]
        %v1042 = vld [vmem:[%s10] sm:$0x1]
        %v1044 = vlaneseq
        %v1045 = vshrl.u32 %v1044, 7
        %v1046 = vsub.s32 0, %v1045
        %v1047 = vrot.slane %v1042, %v1046
        %vm1049 = vcmask 523264
        %v1051 = vsel %vm1049, %v1033, 0
        %1053 = vmatprep.subr.mxu0 0.0
        %1054 = vmatpush1.msra.mxu0 %v1034
        %1055 = vmatprep.subr.mxu0 0.0
        %1056 = vmatpush1.msra.mxu0 %v1035
        %1057 = vmatprep.subr.mxu0 0.0
        %1058 = vmatpush1.msra.mxu0 %v1036
        %1059 = vmatprep.subr.mxu0 0.0
        %1060 = vmatpush1.msra.mxu0 %v1037
        %1061 = vmatprep.subr.mxu0 0.0
        %1062 = vmatpush1.msra.mxu0 %v1038
        %1063 = vmatprep.subr.mxu0 0.0
        %1064 = vmatpush1.msra.mxu0 %v1039
        %1065 = vmatprep.subr.mxu0 0.0
        %1066 = vmatpush1.msra.mxu0 %v1040
        %1067 = vmatprep.subr.mxu0 0.0
        %1068 = vmatpush1.msra.mxu0 %v1041
        %1069 = vmatprep.subr.mxu0 0.0
        %1070 = vmatpush1.msra.mxu0 0.0
        %1071 = vmatprep.subr.mxu0 0.0
        %1072 = vmatpush1.msra.mxu0 0.0
        %1073 = vmatprep.subr.mxu0 0.0
        %1074 = vmatpush1.msra.mxu0 0.0
        %1075 = vmatprep.subr.mxu0 0.0
        %1076 = vmatpush1.msra.mxu0 0.0
        %1077 = vmatprep.subr.mxu0 0.0
        %1078 = vmatpush1.msra.mxu0 0.0
        %1079 = vmatprep.subr.mxu0 0.0
        %1080 = vmatpush1.msra.mxu0 0.0
        %1081 = vmatprep.subr.mxu0 0.0
        %1082 = vmatpush1.msra.mxu0 0.0
        %1083 = vmatprep.subr.mxu0 0.0
        %1084 = vmatpush1.msra.mxu0 0.0
        %1085 = vmatprep.subr.mxu0 0.0
        %1086 = vmatpush1.msra.mxu0 0.0
        %1087 = vmatprep.subr.mxu0 0.0
        %1088 = vmatpush1.msra.mxu0 0.0
        %1089 = vmatprep.subr.mxu0 0.0
        %1090 = vmatpush1.msra.mxu0 0.0
        %1091 = vmatprep.subr.mxu0 0.0
        %1092 = vmatpush1.msra.mxu0 0.0
        %1093 = vmatprep.subr.mxu0 0.0
        %1094 = vmatpush1.msra.mxu0 0.0
        %1095 = vmatprep.subr.mxu0 0.0
        %1096 = vmatpush1.msra.mxu0 0.0
        %1097 = vmatprep.subr.mxu0 0.0
        %1098 = vmatpush1.msra.mxu0 0.0
        %1099 = vmatprep.subr.mxu0 0.0
        %1100 = vmatpush1.msra.mxu0 0.0
        %1101 = vmatprep.subr.mxu0 0.0
        %1102 = vmatpush1.msra.mxu0 0.0
        %1103 = vmatprep.subr.mxu0 0.0
        %1104 = vmatpush1.msra.mxu0 0.0
        %1105 = vmatprep.subr.mxu0 0.0
        %1106 = vmatpush1.msra.mxu0 0.0
        %1107 = vmatprep.subr.mxu0 0.0
        %1108 = vmatpush1.msra.mxu0 0.0
        %1109 = vmatprep.subr.mxu0 0.0
        %1110 = vmatpush1.msra.mxu0 0.0
        %1111 = vmatprep.subr.mxu0 0.0
        %1112 = vmatpush1.msra.mxu0 0.0
        %1113 = vmatprep.subr.mxu0 0.0
        %1114 = vmatpush1.msra.mxu0 0.0
        %1115 = vmatprep.subr.mxu0 0.0
        %1116 = vmatpush1.msra.mxu0 0.0
        %1117 = vmatprep.mubr.f32.mxu0 0.0
        %1118 = vmatmul.mubr.f32.gmra.mrb[0].mxu0 %v1051
        %v1119 = vpop.f32.mrb[0].mxu0
        %v1120 = vadd.f32 %v1047, %v1119
        %v1121 = vpop.f32.mrb[0].mxu0
        %1122 = vdwg.mxu0
        %v1123 = vmax.f32 %v1120, 0.0
        %v1124 = vld [vmem:[%s11] sm:$0xff]
        %v1125 = vld [vmem:[%s11 + $0x8] sm:$0xff]
        %v1126 = vld [vmem:[%s11 + $0x10] sm:$0xff]
        %v1127 = vld [vmem:[%s11 + $0x18] sm:$0xff]
        %v1128 = vld [vmem:[%s12] sm:$0x1]
        %v1130 = vlaneseq
        %v1131 = vshrl.u32 %v1130, 7
        %v1132 = vsub.s32 0, %v1131
        %v1133 = vrot.slane %v1128, %v1132
        %v1136 = vsel %vm951, %v1123, 0
        %1138 = vmatprep.subr.mxu0 0.0
        %1139 = vmatpush1.msra.mxu0 %v1124
        %1140 = vmatprep.subr.mxu0 0.0
        %1141 = vmatpush1.msra.mxu0 %v1125
        %1142 = vmatprep.subr.mxu0 0.0
        %1143 = vmatpush1.msra.mxu0 %v1126
        %1144 = vmatprep.subr.mxu0 0.0
        %1145 = vmatpush1.msra.mxu0 %v1127
        %1146 = vmatprep.subr.mxu0 0.0
        %1147 = vmatpush1.msra.mxu0 0.0
        %1148 = vmatprep.subr.mxu0 0.0
        %1149 = vmatpush1.msra.mxu0 0.0
        %1150 = vmatprep.subr.mxu0 0.0
        %1151 = vmatpush1.msra.mxu0 0.0
        %1152 = vmatprep.subr.mxu0 0.0
        %1153 = vmatpush1.msra.mxu0 0.0
        %1154 = vmatprep.subr.mxu0 0.0
        %1155 = vmatpush1.msra.mxu0 0.0
        %1156 = vmatprep.subr.mxu0 0.0
        %1157 = vmatpush1.msra.mxu0 0.0
        %1158 = vmatprep.subr.mxu0 0.0
        %1159 = vmatpush1.msra.mxu0 0.0
        %1160 = vmatprep.subr.mxu0 0.0
        %1161 = vmatpush1.msra.mxu0 0.0
        %1162 = vmatprep.subr.mxu0 0.0
        %1163 = vmatpush1.msra.mxu0 0.0
        %1164 = vmatprep.subr.mxu0 0.0
        %1165 = vmatpush1.msra.mxu0 0.0
        %1166 = vmatprep.subr.mxu0 0.0
        %1167 = vmatpush1.msra.mxu0 0.0
        %1168 = vmatprep.subr.mxu0 0.0
        %1169 = vmatpush1.msra.mxu0 0.0
        %1170 = vmatprep.subr.mxu0 0.0
        %1171 = vmatpush1.msra.mxu0 0.0
        %1172 = vmatprep.subr.mxu0 0.0
        %1173 = vmatpush1.msra.mxu0 0.0
        %1174 = vmatprep.subr.mxu0 0.0
        %1175 = vmatpush1.msra.mxu0 0.0
        %1176 = vmatprep.subr.mxu0 0.0
        %1177 = vmatpush1.msra.mxu0 0.0
        %1178 = vmatprep.subr.mxu0 0.0
        %1179 = vmatpush1.msra.mxu0 0.0
        %1180 = vmatprep.subr.mxu0 0.0
        %1181 = vmatpush1.msra.mxu0 0.0
        %1182 = vmatprep.subr.mxu0 0.0
        %1183 = vmatpush1.msra.mxu0 0.0
        %1184 = vmatprep.subr.mxu0 0.0
        %1185 = vmatpush1.msra.mxu0 0.0
        %1186 = vmatprep.subr.mxu0 0.0
        %1187 = vmatpush1.msra.mxu0 0.0
        %1188 = vmatprep.subr.mxu0 0.0
        %1189 = vmatpush1.msra.mxu0 0.0
        %1190 = vmatprep.subr.mxu0 0.0
        %1191 = vmatpush1.msra.mxu0 0.0
        %1192 = vmatprep.subr.mxu0 0.0
        %1193 = vmatpush1.msra.mxu0 0.0
        %1194 = vmatprep.subr.mxu0 0.0
        %1195 = vmatpush1.msra.mxu0 0.0
        %1196 = vmatprep.subr.mxu0 0.0
        %1197 = vmatpush1.msra.mxu0 0.0
        %1198 = vmatprep.subr.mxu0 0.0
        %1199 = vmatpush1.msra.mxu0 0.0
        %1200 = vmatprep.subr.mxu0 0.0
        %1201 = vmatpush1.msra.mxu0 0.0
        %1202 = vmatprep.mubr.f32.mxu0 0.0
        %1203 = vmatmul.mubr.f32.gmra.mrb[0].mxu0 %v1136
        %v1204 = vpop.f32.mrb[0].mxu0
        %v1205 = vadd.f32 %v1133, %v1204
        %v1206 = vpop.f32.mrb[0].mxu0
        %1207 = vdwg.mxu0
        %v1208 = vmax.f32 %v1205, 0.0
        %v1209 = vld [vmem:[%s13] sm:$0xff]
        %v1210 = vld [vmem:[%s13 + $0x8] sm:$0xff]
        %v1211 = vld [vmem:[%s13 + $0x10] sm:$0xff]
        %v1212 = vld [vmem:[%s13 + $0x18] sm:$0xff]
        %v1213 = vld [vmem:[%s14] sm:$0x1]
        %v1215 = vlaneseq
        %v1216 = vshrl.u32 %v1215, 7
        %v1217 = vsub.s32 0, %v1216
        %v1218 = vrot.slane %v1213, %v1217
        %v1221 = vsel %vm951, %v1208, 0
        %1223 = vmatprep.subr.mxu0 0.0
        %1224 = vmatpush1.msra.mxu0 %v1209
        %1225 = vmatprep.subr.mxu0 0.0
        %1226 = vmatpush1.msra.mxu0 %v1210
        %1227 = vmatprep.subr.mxu0 0.0
        %1228 = vmatpush1.msra.mxu0 %v1211
        %1229 = vmatprep.subr.mxu0 0.0
        %1230 = vmatpush1.msra.mxu0 %v1212
        %1231 = vmatprep.subr.mxu0 0.0
        %1232 = vmatpush1.msra.mxu0 0.0
        %1233 = vmatprep.subr.mxu0 0.0
        %1234 = vmatpush1.msra.mxu0 0.0
        %1235 = vmatprep.subr.mxu0 0.0
        %1236 = vmatpush1.msra.mxu0 0.0
        %1237 = vmatprep.subr.mxu0 0.0
        %1238 = vmatpush1.msra.mxu0 0.0
        %1239 = vmatprep.subr.mxu0 0.0
        %1240 = vmatpush1.msra.mxu0 0.0
        %1241 = vmatprep.subr.mxu0 0.0
        %1242 = vmatpush1.msra.mxu0 0.0
        %1243 = vmatprep.subr.mxu0 0.0
        %1244 = vmatpush1.msra.mxu0 0.0
        %1245 = vmatprep.subr.mxu0 0.0
        %1246 = vmatpush1.msra.mxu0 0.0
        %1247 = vmatprep.subr.mxu0 0.0
        %1248 = vmatpush1.msra.mxu0 0.0
        %1249 = vmatprep.subr.mxu0 0.0
        %1250 = vmatpush1.msra.mxu0 0.0
        %1251 = vmatprep.subr.mxu0 0.0
        %1252 = vmatpush1.msra.mxu0 0.0
        %1253 = vmatprep.subr.mxu0 0.0
        %1254 = vmatpush1.msra.mxu0 0.0
        %1255 = vmatprep.subr.mxu0 0.0
        %1256 = vmatpush1.msra.mxu0 0.0
        %1257 = vmatprep.subr.mxu0 0.0
        %1258 = vmatpush1.msra.mxu0 0.0
        %1259 = vmatprep.subr.mxu0 0.0
        %1260 = vmatpush1.msra.mxu0 0.0
        %1261 = vmatprep.subr.mxu0 0.0
        %1262 = vmatpush1.msra.mxu0 0.0
        %1263 = vmatprep.subr.mxu0 0.0
        %1264 = vmatpush1.msra.mxu0 0.0
        %1265 = vmatprep.subr.mxu0 0.0
        %1266 = vmatpush1.msra.mxu0 0.0
        %1267 = vmatprep.subr.mxu0 0.0
        %1268 = vmatpush1.msra.mxu0 0.0
        %1269 = vmatprep.subr.mxu0 0.0
        %1270 = vmatpush1.msra.mxu0 0.0
        %1271 = vmatprep.subr.mxu0 0.0
        %1272 = vmatpush1.msra.mxu0 0.0
        %1273 = vmatprep.subr.mxu0 0.0
        %1274 = vmatpush1.msra.mxu0 0.0
        %1275 = vmatprep.subr.mxu0 0.0
        %1276 = vmatpush1.msra.mxu0 0.0
        %1277 = vmatprep.subr.mxu0 0.0
        %1278 = vmatpush1.msra.mxu0 0.0
        %1279 = vmatprep.subr.mxu0 0.0
        %1280 = vmatpush1.msra.mxu0 0.0
        %1281 = vmatprep.subr.mxu0 0.0
        %1282 = vmatpush1.msra.mxu0 0.0
        %1283 = vmatprep.subr.mxu0 0.0
        %1284 = vmatpush1.msra.mxu0 0.0
        %1285 = vmatprep.subr.mxu0 0.0
        %1286 = vmatpush1.msra.mxu0 0.0
        %1287 = vmatprep.mubr.f32.mxu0 0.0
        %1288 = vmatmul.mubr.f32.gmra.mrb[0].mxu0 %v1221
        %v1289 = vpop.f32.mrb[0].mxu0
        %v1290 = vadd.f32 %v1218, %v1289
        %v1291 = vpop.f32.mrb[0].mxu0
        %1292 = vdwg.mxu0
        %1293 = vset.pattern.permute.xlu0 13
        %1294 = vperm.xlu0 %1293, %v490
        %v1295 = vpop.permute.xlu0 %1294
        %v1297 = vmul.f32 %v1290, %v1295
        %1298 = vst.msk [vmem:[%s485] sm:$0xff] %vm951, %v1297
        %s1299 = sand.u32 %s357, 1
        %s1300 = scalar_lea.sflag [#allocation3], %s1299
        %s1301 = sand.u32 %s357, 1
        %s1302 = smul.addr %s1301, 8
        %s1303 = scalar_lea.vmem [#allocation2], %s1302
        // Predicated region
        $region81: #{tpu_custom_call.1} parent=79 // pred_check
          %p1304 = pneg %p367
        $region82: #{tpu_custom_call.1} parent=79 // pred_check_branch
          %1306 = sbr.rel (%p1304) target = $region84
        $region83: #{tpu_custom_call.1} parent=79 // pred_region
          %s1308 = ssub.s32 128, 128
          %1309 = vsyncadd %s1300, %s1308
          %s1310 = smul.addr %s29, 128
          %s1311 = scalar_lea.hbm %s15, %s1310
          %s1313 = sshll.u32 %s1303, 4
          %s1314 = int_to_ptr.vmem [resolvable:$true] %s1313
          %1316 = dma.vmem_to_hbm [thread:$0]  %s1314, 128, %s1311, %s1300
        $region84: #{tpu_custom_call.1} parent=79 // pred_fallthru
          _
      $region80: #{tpu_custom_call.1} parent=5 // pred_fallthru
        _
      %p1317 = scmp.le.s32.totalorder 2, %s24
      // Predicated region
      $region85: #{tpu_custom_call.1} parent=5 // pred_check
        %p1318 = pneg %p1317
      $region86: #{tpu_custom_call.1} parent=5 // pred_check_branch
        %1320 = sbr.rel (%p1318) target = $region88
      $region87: #{tpu_custom_call.1} parent=5 // pred_region
        %s1321 = ssub.s32 %s24, 2
        // Predicated region
        $region89: #{tpu_custom_call.1} parent=87 // pred_check
          %p1322 = pneg %p373
        $region90: #{tpu_custom_call.1} parent=87 // pred_check_branch
          %1324 = sbr.rel (%p1322) target = $region92
        $region91: #{tpu_custom_call.1} parent=87 // pred_region
          %s1325 = sand.u32 %s358, 1
          %s1326 = scalar_lea.sflag [#allocation3], %s1325
          %s1327 = sand.u32 %s358, 1
          %s1328 = smul.addr %s1327, 8
          %s1329 = scalar_lea.vmem [#allocation2], %s1328
          %1330 = dma.done %s1326, 128
        $region92: #{tpu_custom_call.1} parent=87 // pred_fallthru
          _
      $region88: #{tpu_custom_call.1} parent=5 // pred_fallthru
        _
    $region6: #{tpu_custom_call.1} parent=1 // loop_footer
      %s28 = sadd.s32 1, %s24
    $region7: #{tpu_custom_call.1} parent=1 // loop_footer_branch
      %23 = sbr.rel target = $region3
    $region8: #{tpu_custom_call.1} parent=1 // loop_exit
      _
    %1331 = vsyncpa [#allocation3], 1
    %s1332 = scalar_lea.sflag [#allocation3], 1
    %1333 = vsyncpa %s1332, 1

</llo_original>
